<compile_context>
chip_gen: v7x
topology: tpu7x:2x2x1
jax: 0.10.0
libtpu: 0.0.40
codegen_flags: <defaults>
</compile_context>

<pallas_src>
import functools

import jax
import jax.numpy as jnp
from jax import lax
from jax.experimental import pallas as pl
from jax.experimental.pallas import tpu as pltpu

EPS = 1e-5


# ------------------------------- fused Pallas kernel -----------------------------------

def _bottleneck_kernel(x_ref, w1_ref, b1_ref, w2_ref, b2_ref, w3_ref, b3_ref,
                       o_ref, *scratch, stride, hout, wout, cout):
    """Fully-fused ShuffleNet Bottleneck forward for one image.

    x_ref : (H, W, Cin)   NHWC image block (batch dim squeezed by BlockSpec)
    w1_ref: (Cin, mid)    block-diagonal 1x1 conv1 weight, shuffle perm + BN1 scale folded
    b1_ref: (1, mid)      folded BN1 bias (post-shuffle order)
    w2_ref: (3, 3, mid)   depthwise weight with BN2 scale folded
    b2_ref: (1, 1, mid)   folded BN2 bias
    w3_ref: (mid, cout)   block-diagonal 1x1 conv3 weight with BN3 scale folded
    b3_ref: (1, cout)     folded BN3 bias
    o_ref : (hout*wout, cout [+Cin if stride==2])  final activation for this image
    scratch[0]: VMEM (H+2, W+2, mid)   zero-padded y1 (halo handled in VMEM, no jnp.pad)
    scratch[1]: VMEM (H+2, W+2, Cin)   zero-padded x for the avg-pool shortcut (stride 2)
    """
    H, W, cin = x_ref.shape
    mid = w1_ref.shape[1]
    pad1 = scratch[0]

    # ---- conv1 (grouped 1x1 as dense block-diagonal matmul) + BN1 + ReLU --------------
    x2d = x_ref[...].reshape(H * W, cin)
    y1 = jnp.dot(x2d, w1_ref[...], preferred_element_type=jnp.float32) + b1_ref[...]
    y1 = jnp.maximum(y1, 0.0)

    # ---- depthwise 3x3 (stride, pad=1) + BN2 + ReLU; halo in VMEM scratch --------------
    pad1[...] = jnp.zeros_like(pad1)
    pad1[1:H + 1, 1:W + 1, :] = y1.reshape(H, W, mid)
    w2 = w2_ref[...]
    acc = jnp.zeros((hout, wout, mid), jnp.float32)
    for kh in range(3):
        for kw in range(3):
            if stride == 1:
                win = pad1[pl.ds(kh, hout), pl.ds(kw, wout), :]
            else:
                win = pad1[pl.ds(kh, hout, stride), pl.ds(kw, wout, stride), :]
            acc = acc + win * w2[kh, kw]
    y2 = jnp.maximum(acc + b2_ref[...], 0.0)

    # ---- conv3 (grouped 1x1 as dense block-diagonal matmul) + BN3 ----------------------
    y3 = jnp.dot(y2.reshape(hout * wout, mid), w3_ref[...],
                 preferred_element_type=jnp.float32) + b3_ref[...]

    if stride == 2:
        # ---- shortcut: AvgPool2d(3, stride=2, padding=1), count_include_pad -> /9 ------
        padx = scratch[1]
        padx[...] = jnp.zeros_like(padx)
        padx[1:H + 1, 1:W + 1, :] = x_ref[...]
        racc = jnp.zeros((hout, wout, cin), jnp.float32)
        for kh in range(3):
            for kw in range(3):
                racc = racc + padx[pl.ds(kh, hout, 2), pl.ds(kw, wout, 2), :]
        res = (racc * (1.0 / 9.0)).reshape(hout * wout, cin)
        # fused concat + ReLU (single kernel, no extra HBM pass)
        o_ref[:, :cout] = jnp.maximum(y3, 0.0).astype(o_ref.dtype)
        o_ref[:, cout:] = jnp.maximum(res, 0.0).astype(o_ref.dtype)
    else:
        # fused residual add + ReLU (x is already resident in VMEM)
        o_ref[...] = jnp.maximum(y3 + x2d, 0.0).astype(o_ref.dtype)


# ------------------------------- glue helpers -------------------------------------------

def dense_from_grouped_1x1(w, groups):
    """PyTorch grouped 1x1 conv weight [Cout, Cin/g, 1, 1] -> dense [Cin, Cout] block-diag."""
    cout, cin_g = w.shape[0], w.shape[1]
    w2 = w[:, :, 0, 0]
    cin = cin_g * groups
    cout_g = cout // groups
    dense = jnp.zeros((cin, cout), w.dtype)
    for gi in range(groups):
        blk = w2[gi * cout_g:(gi + 1) * cout_g, :]            # [cout_g, cin_g]
        dense = dense.at[gi * cin_g:(gi + 1) * cin_g,
                         gi * cout_g:(gi + 1) * cout_g].set(blk.T)
    return dense


def shuffle_perm(c, g):
    """new_channel[k] = old_channel[perm[k]] for the ShuffleBlock permutation."""
    k = jnp.arange(c)
    return (k % g) * (c // g) + (k // g)


def bn_fold(gamma, beta, rm, rv):
    scale = gamma / jnp.sqrt(rv + EPS)
    bias = beta - rm * scale
    return scale, bias


# ------------------------------- Bottleneck forward (Pallas) ----------------------------

def bottleneck_pallas(x_nchw, p, *, in_planes, out_planes, stride, groups):
    n, cin, h, w = x_nchw.shape
    assert cin == in_planes
    mid = out_planes // 4
    g1 = 1 if in_planes == 24 else groups
    if stride == 1:
        assert in_planes == out_planes, "stride-1 residual add needs matching channels"

    hout = (h + 2 - 3) // stride + 1
    wout = (w + 2 - 3) // stride + 1
    ctot = out_planes + (cin if stride == 2 else 0)

    # ---- host-side parameter folding (BN scale into weights, shuffle into conv1 cols) --
    s1, b1 = bn_fold(p["bn1_w"], p["bn1_b"], p["bn1_rm"], p["bn1_rv"])
    s2, b2 = bn_fold(p["bn2_w"], p["bn2_b"], p["bn2_rm"], p["bn2_rv"])
    s3, b3 = bn_fold(p["bn3_w"], p["bn3_b"], p["bn3_rm"], p["bn3_rv"])

    perm = shuffle_perm(mid, g1)
    w1 = dense_from_grouped_1x1(p["w1"], g1)[:, perm] * s1[perm][None, :]   # [Cin, mid]
    b1 = b1[perm]
    w2 = jnp.transpose(p["w2"][:, 0], (1, 2, 0)) * s2[None, None, :]        # [3, 3, mid]
    w3 = dense_from_grouped_1x1(p["w3"], groups) * s3[None, :]              # [mid, Cout]

    x = jnp.transpose(x_nchw, (0, 2, 3, 1))                                 # NHWC

    kern = functools.partial(_bottleneck_kernel, stride=stride,
                             hout=hout, wout=wout, cout=out_planes)

    scratch = [pltpu.VMEM((h + 2, w + 2, mid), jnp.float32)]
    if stride == 2:
        scratch.append(pltpu.VMEM((h + 2, w + 2, cin), jnp.float32))

    out = pl.pallas_call(
        kern,
        out_shape=jax.ShapeDtypeStruct((n, hout * wout, ctot), x.dtype),
        grid=(n,),
        in_specs=[
            pl.BlockSpec((None, h, w, cin), lambda b: (b, 0, 0, 0)),
            pl.BlockSpec((cin, mid), lambda b: (0, 0)),
            pl.BlockSpec((1, mid), lambda b: (0, 0)),
            pl.BlockSpec((3, 3, mid), lambda b: (0, 0, 0)),
            pl.BlockSpec((1, 1, mid), lambda b: (0, 0, 0)),
            pl.BlockSpec((mid, out_planes), lambda b: (0, 0)),
            pl.BlockSpec((1, out_planes), lambda b: (0, 0)),
        ],
        out_specs=pl.BlockSpec((None, hout * wout, ctot), lambda b: (b, 0, 0)),
        scratch_shapes=scratch,
        compiler_params=pltpu.CompilerParams(dimension_semantics=("parallel",)),
    )(x, w1, b1.reshape(1, mid), w2, b2.reshape(1, 1, mid),
      w3, b3.reshape(1, out_planes))

    out = out.reshape(n, hout, wout, ctot)
    return jnp.transpose(out, (0, 3, 1, 2))                                 # back to NCHW


# ------------------------------- deterministic params -----------------------------------

def init_params(key, in_planes, out_planes, groups):
    mid = out_planes // 4
    g1 = 1 if in_planes == 24 else groups
    ks = jax.random.split(key, 15)

    def nrm(k, shape, s=0.1):
        return s * jax.random.normal(k, shape, jnp.float32)

    def uni(k, shape):
        return jax.random.uniform(k, shape, jnp.float32, 0.5, 1.5)

    return dict(
        w1=nrm(ks[0], (mid, in_planes // g1, 1, 1)),
        bn1_w=uni(ks[1], (mid,)), bn1_b=nrm(ks[2], (mid,)),
        bn1_rm=nrm(ks[3], (mid,)), bn1_rv=uni(ks[4], (mid,)),
        w2=nrm(ks[5], (mid, 1, 3, 3)),
        bn2_w=uni(ks[6], (mid,)), bn2_b=nrm(ks[7], (mid,)),
        bn2_rm=nrm(ks[8], (mid,)), bn2_rv=uni(ks[9], (mid,)),
        w3=nrm(ks[10], (out_planes, mid // groups, 1, 1)),
        bn3_w=uni(ks[11], (out_planes,)), bn3_b=nrm(ks[12], (out_planes,)),
        bn3_rm=nrm(ks[13], (out_planes,)), bn3_rv=uni(ks[14], (out_planes,)),
    )


# ------------------------------- pure-JAX reference (for checking) ----------------------

def bottleneck_ref(x, p, *, in_planes, out_planes, stride, groups):
    mid = out_planes // 4
    g1 = 1 if in_planes == 24 else groups
    dn = ("NCHW", "OIHW", "NCHW")

    def bn(y, gamma, beta, rm, rv):
        sh = (1, -1, 1, 1)
        return ((y - rm.reshape(sh)) / jnp.sqrt(rv.reshape(sh) + EPS)
                * gamma.reshape(sh) + beta.reshape(sh))

    y = lax.conv_general_dilated(x, p["w1"], (1, 1), "VALID",
                                 feature_group_count=g1, dimension_numbers=dn)
    y = jax.nn.relu(bn(y, p["bn1_w"], p["bn1_b"], p["bn1_rm"], p["bn1_rv"]))
    n, c, h, w = y.shape
    y = y.reshape(n, g1, c // g1, h, w).transpose(0, 2, 1, 3, 4).reshape(n, c, h, w)
    y = lax.conv_general_dilated(y, p["w2"], (stride, stride), ((1, 1), (1, 1)),
                                 feature_group_count=mid, dimension_numbers=dn)
    y = jax.nn.relu(bn(y, p["bn2_w"], p["bn2_b"], p["bn2_rm"], p["bn2_rv"]))
    y = lax.conv_general_dilated(y, p["w3"], (1, 1), "VALID",
                                 feature_group_count=groups, dimension_numbers=dn)
    y = bn(y, p["bn3_w"], p["bn3_b"], p["bn3_rm"], p["bn3_rv"])
    if stride == 2:
        res = lax.reduce_window(x, 0.0, lax.add, (1, 1, 3, 3), (1, 1, 2, 2),
                                ((0, 0), (0, 0), (1, 1), (1, 1))) / 9.0
        return jax.nn.relu(jnp.concatenate([y, res], axis=1))
    return jax.nn.relu(y + x)


# ------------------------------- main ----------------------------------------------------

if __name__ == "__main__":
    configs = [
        dict(in_planes=16, out_planes=32, stride=2, groups=2, N=2, H=16, W=16),
        dict(in_planes=32, out_planes=32, stride=1, groups=2, N=2, H=16, W=16),
    ]
    root = jax.random.PRNGKey(0)
    for i, cfg in enumerate(configs):
        kx, kp = jax.random.split(jax.random.fold_in(root, i))
        x = jax.random.normal(kx, (cfg["N"], cfg["in_planes"], cfg["H"], cfg["W"]),
                              jnp.float32)
        params = init_params(kp, cfg["in_planes"], cfg["out_planes"], cfg["groups"])

        fwd = jax.jit(functools.partial(
            bottleneck_pallas, in_planes=cfg["in_planes"], out_planes=cfg["out_planes"],
            stride=cfg["stride"], groups=cfg["groups"]))
        out = jax.block_until_ready(fwd(x, params))

        ref = bottleneck_ref(x, params, in_planes=cfg["in_planes"],
                             out_planes=cfg["out_planes"], stride=cfg["stride"],
                             groups=cfg["groups"])
        assert out.shape == ref.shape, (out.shape, ref.shape)
        assert jnp.allclose(out, ref, atol=1e-4, rtol=1e-4), \
            float(jnp.max(jnp.abs(out - ref)))

    print("KERNEL_OK")
</pallas_src>

<mosaic_0001>
module attributes {stable_mosaic.version = 11 : i64} {
  func.func @_bottleneck_kernel(%arg0: i32, %arg1: memref<1x16x16x16xf32, #tpu.memory_space<vmem>>, %arg2: memref<16x8xf32, #tpu.memory_space<vmem>>, %arg3: memref<1x8xf32, #tpu.memory_space<vmem>>, %arg4: memref<3x3x8xf32, #tpu.memory_space<vmem>>, %arg5: memref<1x1x8xf32, #tpu.memory_space<vmem>>, %arg6: memref<8x32xf32, #tpu.memory_space<vmem>>, %arg7: memref<1x32xf32, #tpu.memory_space<vmem>>, %arg8: memref<1x64x48xf32, #tpu.memory_space<vmem>>, %arg9: memref<18x18x8xf32, #tpu.memory_space<vmem>>, %arg10: memref<18x18x16xf32, #tpu.memory_space<vmem>>) attributes {dimension_semantics = [#tpu.dimension_semantics<parallel>], iteration_bounds = array<i64: 2>, scalar_prefetch = 0 : i64, scratch_operands = 2 : i64, tpu.core_type = #tpu.core_type<tc>, window_params = [{transform_indices = @transform_0, window_bounds = array<i64: 1, 16, 16, 16>}, {pipeline_mode = #tpu.pipeline_mode<synchronous>, transform_indices = @transform_1, window_bounds = array<i64: 16, 8>}, {pipeline_mode = #tpu.pipeline_mode<synchronous>, transform_indices = @transform_2, window_bounds = array<i64: 1, 8>}, {pipeline_mode = #tpu.pipeline_mode<synchronous>, transform_indices = @transform_3, window_bounds = array<i64: 3, 3, 8>}, {pipeline_mode = #tpu.pipeline_mode<synchronous>, transform_indices = @transform_4, window_bounds = array<i64: 1, 1, 8>}, {pipeline_mode = #tpu.pipeline_mode<synchronous>, transform_indices = @transform_5, window_bounds = array<i64: 8, 32>}, {pipeline_mode = #tpu.pipeline_mode<synchronous>, transform_indices = @transform_6, window_bounds = array<i64: 1, 32>}, {transform_indices = @transform_7, window_bounds = array<i64: 1, 64, 48>}]} {
    %c0 = arith.constant 0 : index
    %c0_0 = arith.constant 0 : index
    %c0_1 = arith.constant 0 : index
    %c0_2 = arith.constant 0 : index
    %0 = vector.load %arg1[%c0, %c0_0, %c0_1, %c0_2] : memref<1x16x16x16xf32, #tpu.memory_space<vmem>>, vector<1x16x16x16xf32>
    %1 = vector.shape_cast %0 : vector<1x16x16x16xf32> to vector<16x16x16xf32>
    %2 = vector.shape_cast %1 : vector<16x16x16xf32> to vector<256x16xf32>
    %c0_3 = arith.constant 0 : index
    %c0_4 = arith.constant 0 : index
    %3 = vector.load %arg2[%c0_3, %c0_4] : memref<16x8xf32, #tpu.memory_space<vmem>>, vector<16x8xf32>
    %cst = arith.constant dense<0.000000e+00> : vector<256x8xf32>
    %4 = tpu.matmul %2, %3, %cst {dimension_numbers = #tpu.dot_dimension_numbers<[1], [0], [0], [1], [0, 0, 1, 1], [], []>} : vector<256x16xf32>, vector<16x8xf32>, vector<256x8xf32> -> vector<256x8xf32>
    %c0_5 = arith.constant 0 : index
    %c0_6 = arith.constant 0 : index
    %5 = vector.load %arg3[%c0_5, %c0_6] : memref<1x8xf32, #tpu.memory_space<vmem>>, vector<1x8xf32>
    %6 = vector.broadcast %5 : vector<1x8xf32> to vector<256x8xf32>
    %7 = arith.addf %4, %6 : vector<256x8xf32>
    %cst_7 = arith.constant 0.000000e+00 : f32
    %8 = vector.broadcast %cst_7 : f32 to vector<256x8xf32>
    %9 = arith.maximumf %7, %8 : vector<256x8xf32>
    %cst_8 = arith.constant 0.000000e+00 : f32
    %10 = vector.broadcast %cst_8 : f32 to vector<18x18x8xf32>
    %c0_9 = arith.constant 0 : index
    %c0_10 = arith.constant 0 : index
    %c0_11 = arith.constant 0 : index
    %11 = vector.load %arg9[%c0_9, %c0_10, %c0_11] : memref<18x18x8xf32, #tpu.memory_space<vmem>>, vector<18x18x8xf32>
    tpu.vector_store %arg9[%c0_9, %c0_10, %c0_11], %10 {strides = array<i32>} : memref<18x18x8xf32, #tpu.memory_space<vmem>>, vector<18x18x8xf32>,
    %12 = vector.shape_cast %9 : vector<256x8xf32> to vector<16x16x8xf32>
    %c1 = arith.constant 1 : index
    %c1_12 = arith.constant 1 : index
    %c0_13 = arith.constant 0 : index
    %13 = vector.load %arg9[%c1, %c1_12, %c0_13] : memref<18x18x8xf32, #tpu.memory_space<vmem>>, vector<16x16x8xf32>
    tpu.vector_store %arg9[%c1, %c1_12, %c0_13], %12 {strides = array<i32>} : memref<18x18x8xf32, #tpu.memory_space<vmem>>, vector<16x16x8xf32>,
    %c0_14 = arith.constant 0 : index
    %c0_15 = arith.constant 0 : index
    %c0_16 = arith.constant 0 : index
    %14 = vector.load %arg4[%c0_14, %c0_15, %c0_16] : memref<3x3x8xf32, #tpu.memory_space<vmem>>, vector<3x3x8xf32>
    %cst_17 = arith.constant 0.000000e+00 : f32
    %15 = vector.broadcast %cst_17 : f32 to vector<8x8x8xf32>
    %c0_18 = arith.constant 0 : index
    %c0_19 = arith.constant 0 : index
    %c0_20 = arith.constant 0 : index
    %16 = tpu.strided_load %arg9[%c0_18, %c0_19, %c0_20] {strides = array<i32: 2, 2, 1>} : memref<18x18x8xf32, #tpu.memory_space<vmem>>, vector<8x8x8xf32>
    %17 = vector.extract_strided_slice %14 {offsets = [0, 0, 0], sizes = [1, 1, 8], strides = [1, 1, 1]} : vector<3x3x8xf32> to vector<1x1x8xf32>
    %18 = vector.shape_cast %17 : vector<1x1x8xf32> to vector<8xf32>
    %19 = vector.shape_cast %18 : vector<8xf32> to vector<1x1x8xf32>
    %20 = vector.broadcast %19 : vector<1x1x8xf32> to vector<8x8x8xf32>
    %21 = arith.mulf %16, %20 : vector<8x8x8xf32>
    %22 = arith.addf %15, %21 : vector<8x8x8xf32>
    %c0_21 = arith.constant 0 : index
    %c1_22 = arith.constant 1 : index
    %c0_23 = arith.constant 0 : index
    %23 = tpu.strided_load %arg9[%c0_21, %c1_22, %c0_23] {strides = array<i32: 2, 2, 1>} : memref<18x18x8xf32, #tpu.memory_space<vmem>>, vector<8x8x8xf32>
    %24 = vector.extract_strided_slice %14 {offsets = [0, 1, 0], sizes = [1, 1, 8], strides = [1, 1, 1]} : vector<3x3x8xf32> to vector<1x1x8xf32>
    %25 = vector.shape_cast %24 : vector<1x1x8xf32> to vector<8xf32>
    %26 = vector.shape_cast %25 : vector<8xf32> to vector<1x1x8xf32>
    %27 = vector.broadcast %26 : vector<1x1x8xf32> to vector<8x8x8xf32>
    %28 = arith.mulf %23, %27 : vector<8x8x8xf32>
    %29 = arith.addf %22, %28 : vector<8x8x8xf32>
    %c0_24 = arith.constant 0 : index
    %c2 = arith.constant 2 : index
    %c0_25 = arith.constant 0 : index
    %30 = tpu.strided_load %arg9[%c0_24, %c2, %c0_25] {strides = array<i32: 2, 2, 1>} : memref<18x18x8xf32, #tpu.memory_space<vmem>>, vector<8x8x8xf32>
    %31 = vector.extract_strided_slice %14 {offsets = [0, 2, 0], sizes = [1, 1, 8], strides = [1, 1, 1]} : vector<3x3x8xf32> to vector<1x1x8xf32>
    %32 = vector.shape_cast %31 : vector<1x1x8xf32> to vector<8xf32>
    %33 = vector.shape_cast %32 : vector<8xf32> to vector<1x1x8xf32>
    %34 = vector.broadcast %33 : vector<1x1x8xf32> to vector<8x8x8xf32>
    %35 = arith.mulf %30, %34 : vector<8x8x8xf32>
    %36 = arith.addf %29, %35 : vector<8x8x8xf32>
    %c1_26 = arith.constant 1 : index
    %c0_27 = arith.constant 0 : index
    %c0_28 = arith.constant 0 : index
    %37 = tpu.strided_load %arg9[%c1_26, %c0_27, %c0_28] {strides = array<i32: 2, 2, 1>} : memref<18x18x8xf32, #tpu.memory_space<vmem>>, vector<8x8x8xf32>
    %38 = vector.extract_strided_slice %14 {offsets = [1, 0, 0], sizes = [1, 1, 8], strides = [1, 1, 1]} : vector<3x3x8xf32> to vector<1x1x8xf32>
    %39 = vector.shape_cast %38 : vector<1x1x8xf32> to vector<8xf32>
    %40 = vector.shape_cast %39 : vector<8xf32> to vector<1x1x8xf32>
    %41 = vector.broadcast %40 : vector<1x1x8xf32> to vector<8x8x8xf32>
    %42 = arith.mulf %37, %41 : vector<8x8x8xf32>
    %43 = arith.addf %36, %42 : vector<8x8x8xf32>
    %c1_29 = arith.constant 1 : index
    %c1_30 = arith.constant 1 : index
    %c0_31 = arith.constant 0 : index
    %44 = tpu.strided_load %arg9[%c1_29, %c1_30, %c0_31] {strides = array<i32: 2, 2, 1>} : memref<18x18x8xf32, #tpu.memory_space<vmem>>, vector<8x8x8xf32>
    %45 = vector.extract_strided_slice %14 {offsets = [1, 1, 0], sizes = [1, 1, 8], strides = [1, 1, 1]} : vector<3x3x8xf32> to vector<1x1x8xf32>
    %46 = vector.shape_cast %45 : vector<1x1x8xf32> to vector<8xf32>
    %47 = vector.shape_cast %46 : vector<8xf32> to vector<1x1x8xf32>
    %48 = vector.broadcast %47 : vector<1x1x8xf32> to vector<8x8x8xf32>
    %49 = arith.mulf %44, %48 : vector<8x8x8xf32>
    %50 = arith.addf %43, %49 : vector<8x8x8xf32>
    %c1_32 = arith.constant 1 : index
    %c2_33 = arith.constant 2 : index
    %c0_34 = arith.constant 0 : index
    %51 = tpu.strided_load %arg9[%c1_32, %c2_33, %c0_34] {strides = array<i32: 2, 2, 1>} : memref<18x18x8xf32, #tpu.memory_space<vmem>>, vector<8x8x8xf32>
    %52 = vector.extract_strided_slice %14 {offsets = [1, 2, 0], sizes = [1, 1, 8], strides = [1, 1, 1]} : vector<3x3x8xf32> to vector<1x1x8xf32>
    %53 = vector.shape_cast %52 : vector<1x1x8xf32> to vector<8xf32>
    %54 = vector.shape_cast %53 : vector<8xf32> to vector<1x1x8xf32>
    %55 = vector.broadcast %54 : vector<1x1x8xf32> to vector<8x8x8xf32>
    %56 = arith.mulf %51, %55 : vector<8x8x8xf32>
    %57 = arith.addf %50, %56 : vector<8x8x8xf32>
    %c2_35 = arith.constant 2 : index
    %c0_36 = arith.constant 0 : index
    %c0_37 = arith.constant 0 : index
    %58 = tpu.strided_load %arg9[%c2_35, %c0_36, %c0_37] {strides = array<i32: 2, 2, 1>} : memref<18x18x8xf32, #tpu.memory_space<vmem>>, vector<8x8x8xf32>
    %59 = vector.extract_strided_slice %14 {offsets = [2, 0, 0], sizes = [1, 1, 8], strides = [1, 1, 1]} : vector<3x3x8xf32> to vector<1x1x8xf32>
    %60 = vector.shape_cast %59 : vector<1x1x8xf32> to vector<8xf32>
    %61 = vector.shape_cast %60 : vector<8xf32> to vector<1x1x8xf32>
    %62 = vector.broadcast %61 : vector<1x1x8xf32> to vector<8x8x8xf32>
    %63 = arith.mulf %58, %62 : vector<8x8x8xf32>
    %64 = arith.addf %57, %63 : vector<8x8x8xf32>
    %c2_38 = arith.constant 2 : index
    %c1_39 = arith.constant 1 : index
    %c0_40 = arith.constant 0 : index
    %65 = tpu.strided_load %arg9[%c2_38, %c1_39, %c0_40] {strides = array<i32: 2, 2, 1>} : memref<18x18x8xf32, #tpu.memory_space<vmem>>, vector<8x8x8xf32>
    %66 = vector.extract_strided_slice %14 {offsets = [2, 1, 0], sizes = [1, 1, 8], strides = [1, 1, 1]} : vector<3x3x8xf32> to vector<1x1x8xf32>
    %67 = vector.shape_cast %66 : vector<1x1x8xf32> to vector<8xf32>
    %68 = vector.shape_cast %67 : vector<8xf32> to vector<1x1x8xf32>
    %69 = vector.broadcast %68 : vector<1x1x8xf32> to vector<8x8x8xf32>
    %70 = arith.mulf %65, %69 : vector<8x8x8xf32>
    %71 = arith.addf %64, %70 : vector<8x8x8xf32>
    %c2_41 = arith.constant 2 : index
    %c2_42 = arith.constant 2 : index
    %c0_43 = arith.constant 0 : index
    %72 = tpu.strided_load %arg9[%c2_41, %c2_42, %c0_43] {strides = array<i32: 2, 2, 1>} : memref<18x18x8xf32, #tpu.memory_space<vmem>>, vector<8x8x8xf32>
    %73 = vector.extract_strided_slice %14 {offsets = [2, 2, 0], sizes = [1, 1, 8], strides = [1, 1, 1]} : vector<3x3x8xf32> to vector<1x1x8xf32>
    %74 = vector.shape_cast %73 : vector<1x1x8xf32> to vector<8xf32>
    %75 = vector.shape_cast %74 : vector<8xf32> to vector<1x1x8xf32>
    %76 = vector.broadcast %75 : vector<1x1x8xf32> to vector<8x8x8xf32>
    %77 = arith.mulf %72, %76 : vector<8x8x8xf32>
    %78 = arith.addf %71, %77 : vector<8x8x8xf32>
    %c0_44 = arith.constant 0 : index
    %c0_45 = arith.constant 0 : index
    %c0_46 = arith.constant 0 : index
    %79 = vector.load %arg5[%c0_44, %c0_45, %c0_46] : memref<1x1x8xf32, #tpu.memory_space<vmem>>, vector<1x1x8xf32>
    %80 = vector.broadcast %79 : vector<1x1x8xf32> to vector<8x8x8xf32>
    %81 = arith.addf %78, %80 : vector<8x8x8xf32>
    %cst_47 = arith.constant 0.000000e+00 : f32
    %82 = vector.broadcast %cst_47 : f32 to vector<8x8x8xf32>
    %83 = arith.maximumf %81, %82 : vector<8x8x8xf32>
    %84 = vector.shape_cast %83 : vector<8x8x8xf32> to vector<64x8xf32>
    %c0_48 = arith.constant 0 : index
    %c0_49 = arith.constant 0 : index
    %85 = vector.load %arg6[%c0_48, %c0_49] : memref<8x32xf32, #tpu.memory_space<vmem>>, vector<8x32xf32>
    %cst_50 = arith.constant dense<0.000000e+00> : vector<64x32xf32>
    %86 = tpu.matmul %84, %85, %cst_50 {dimension_numbers = #tpu.dot_dimension_numbers<[1], [0], [0], [1], [0, 0, 1, 1], [], []>} : vector<64x8xf32>, vector<8x32xf32>, vector<64x32xf32> -> vector<64x32xf32>
    %c0_51 = arith.constant 0 : index
    %c0_52 = arith.constant 0 : index
    %87 = vector.load %arg7[%c0_51, %c0_52] : memref<1x32xf32, #tpu.memory_space<vmem>>, vector<1x32xf32>
    %88 = vector.broadcast %87 : vector<1x32xf32> to vector<64x32xf32>
    %89 = arith.addf %86, %88 : vector<64x32xf32>
    %cst_53 = arith.constant 0.000000e+00 : f32
    %90 = vector.broadcast %cst_53 : f32 to vector<18x18x16xf32>
    %c0_54 = arith.constant 0 : index
    %c0_55 = arith.constant 0 : index
    %c0_56 = arith.constant 0 : index
    %91 = vector.load %arg10[%c0_54, %c0_55, %c0_56] : memref<18x18x16xf32, #tpu.memory_space<vmem>>, vector<18x18x16xf32>
    tpu.vector_store %arg10[%c0_54, %c0_55, %c0_56], %90 {strides = array<i32>} : memref<18x18x16xf32, #tpu.memory_space<vmem>>, vector<18x18x16xf32>,
    %c0_57 = arith.constant 0 : index
    %c0_58 = arith.constant 0 : index
    %c0_59 = arith.constant 0 : index
    %c0_60 = arith.constant 0 : index
    %92 = vector.load %arg1[%c0_57, %c0_58, %c0_59, %c0_60] : memref<1x16x16x16xf32, #tpu.memory_space<vmem>>, vector<1x16x16x16xf32>
    %93 = vector.shape_cast %92 : vector<1x16x16x16xf32> to vector<16x16x16xf32>
    %c1_61 = arith.constant 1 : index
    %c1_62 = arith.constant 1 : index
    %c0_63 = arith.constant 0 : index
    %94 = vector.load %arg10[%c1_61, %c1_62, %c0_63] : memref<18x18x16xf32, #tpu.memory_space<vmem>>, vector<16x16x16xf32>
    tpu.vector_store %arg10[%c1_61, %c1_62, %c0_63], %93 {strides = array<i32>} : memref<18x18x16xf32, #tpu.memory_space<vmem>>, vector<16x16x16xf32>,
    %cst_64 = arith.constant 0.000000e+00 : f32
    %95 = vector.broadcast %cst_64 : f32 to vector<8x8x16xf32>
    %c0_65 = arith.constant 0 : index
    %c0_66 = arith.constant 0 : index
    %c0_67 = arith.constant 0 : index
    %96 = tpu.strided_load %arg10[%c0_65, %c0_66, %c0_67] {strides = array<i32: 2, 2, 1>} : memref<18x18x16xf32, #tpu.memory_space<vmem>>, vector<8x8x16xf32>
    %97 = arith.addf %95, %96 : vector<8x8x16xf32>
    %c0_68 = arith.constant 0 : index
    %c1_69 = arith.constant 1 : index
    %c0_70 = arith.constant 0 : index
    %98 = tpu.strided_load %arg10[%c0_68, %c1_69, %c0_70] {strides = array<i32: 2, 2, 1>} : memref<18x18x16xf32, #tpu.memory_space<vmem>>, vector<8x8x16xf32>
    %99 = arith.addf %97, %98 : vector<8x8x16xf32>
    %c0_71 = arith.constant 0 : index
    %c2_72 = arith.constant 2 : index
    %c0_73 = arith.constant 0 : index
    %100 = tpu.strided_load %arg10[%c0_71, %c2_72, %c0_73] {strides = array<i32: 2, 2, 1>} : memref<18x18x16xf32, #tpu.memory_space<vmem>>, vector<8x8x16xf32>
    %101 = arith.addf %99, %100 : vector<8x8x16xf32>
    %c1_74 = arith.constant 1 : index
    %c0_75 = arith.constant 0 : index
    %c0_76 = arith.constant 0 : index
    %102 = tpu.strided_load %arg10[%c1_74, %c0_75, %c0_76] {strides = array<i32: 2, 2, 1>} : memref<18x18x16xf32, #tpu.memory_space<vmem>>, vector<8x8x16xf32>
    %103 = arith.addf %101, %102 : vector<8x8x16xf32>
    %c1_77 = arith.constant 1 : index
    %c1_78 = arith.constant 1 : index
    %c0_79 = arith.constant 0 : index
    %104 = tpu.strided_load %arg10[%c1_77, %c1_78, %c0_79] {strides = array<i32: 2, 2, 1>} : memref<18x18x16xf32, #tpu.memory_space<vmem>>, vector<8x8x16xf32>
    %105 = arith.addf %103, %104 : vector<8x8x16xf32>
    %c1_80 = arith.constant 1 : index
    %c2_81 = arith.constant 2 : index
    %c0_82 = arith.constant 0 : index
    %106 = tpu.strided_load %arg10[%c1_80, %c2_81, %c0_82] {strides = array<i32: 2, 2, 1>} : memref<18x18x16xf32, #tpu.memory_space<vmem>>, vector<8x8x16xf32>
    %107 = arith.addf %105, %106 : vector<8x8x16xf32>
    %c2_83 = arith.constant 2 : index
    %c0_84 = arith.constant 0 : index
    %c0_85 = arith.constant 0 : index
    %108 = tpu.strided_load %arg10[%c2_83, %c0_84, %c0_85] {strides = array<i32: 2, 2, 1>} : memref<18x18x16xf32, #tpu.memory_space<vmem>>, vector<8x8x16xf32>
    %109 = arith.addf %107, %108 : vector<8x8x16xf32>
    %c2_86 = arith.constant 2 : index
    %c1_87 = arith.constant 1 : index
    %c0_88 = arith.constant 0 : index
    %110 = tpu.strided_load %arg10[%c2_86, %c1_87, %c0_88] {strides = array<i32: 2, 2, 1>} : memref<18x18x16xf32, #tpu.memory_space<vmem>>, vector<8x8x16xf32>
    %111 = arith.addf %109, %110 : vector<8x8x16xf32>
    %c2_89 = arith.constant 2 : index
    %c2_90 = arith.constant 2 : index
    %c0_91 = arith.constant 0 : index
    %112 = tpu.strided_load %arg10[%c2_89, %c2_90, %c0_91] {strides = array<i32: 2, 2, 1>} : memref<18x18x16xf32, #tpu.memory_space<vmem>>, vector<8x8x16xf32>
    %113 = arith.addf %111, %112 : vector<8x8x16xf32>
    %cst_92 = arith.constant 0.111111112 : f32
    %114 = vector.broadcast %cst_92 : f32 to vector<8x8x16xf32>
    %115 = arith.mulf %113, %114 : vector<8x8x16xf32>
    %116 = vector.shape_cast %115 : vector<8x8x16xf32> to vector<64x16xf32>
    %cst_93 = arith.constant 0.000000e+00 : f32
    %117 = vector.broadcast %cst_93 : f32 to vector<64x32xf32>
    %118 = arith.maximumf %89, %117 : vector<64x32xf32>
    %c0_94 = arith.constant 0 : index
    %c0_95 = arith.constant 0 : index
    %c0_96 = arith.constant 0 : index
    %119 = vector.load %arg8[%c0_94, %c0_95, %c0_96] : memref<1x64x48xf32, #tpu.memory_space<vmem>>, vector<1x64x32xf32>
    %120 = vector.shape_cast %119 : vector<1x64x32xf32> to vector<64x32xf32>
    %121 = vector.shape_cast %118 : vector<64x32xf32> to vector<1x64x32xf32>
    tpu.vector_store %arg8[%c0_94, %c0_95, %c0_96], %121 {strides = array<i32>} : memref<1x64x48xf32, #tpu.memory_space<vmem>>, vector<1x64x32xf32>,
    %cst_97 = arith.constant 0.000000e+00 : f32
    %122 = vector.broadcast %cst_97 : f32 to vector<64x16xf32>
    %123 = arith.maximumf %116, %122 : vector<64x16xf32>
    %c0_98 = arith.constant 0 : index
    %c0_99 = arith.constant 0 : index
    %c32 = arith.constant 32 : index
    %124 = vector.load %arg8[%c0_98, %c0_99, %c32] : memref<1x64x48xf32, #tpu.memory_space<vmem>>, vector<1x64x16xf32>
    %125 = vector.shape_cast %124 : vector<1x64x16xf32> to vector<64x16xf32>
    %126 = vector.shape_cast %123 : vector<64x16xf32> to vector<1x64x16xf32>
    tpu.vector_store %arg8[%c0_98, %c0_99, %c32], %126 {strides = array<i32>} : memref<1x64x48xf32, #tpu.memory_space<vmem>>, vector<1x64x16xf32>,
    return
  }
  func.func @transform_0(%arg0: i32) -> (i32, i32, i32, i32) {
    %c0_i32 = arith.constant 0 : i32
    %c0_i32_0 = arith.constant 0 : i32
    %c0_i32_1 = arith.constant 0 : i32
    %c0_i32_2 = arith.constant 0 : i32
    return %arg0, %c0_i32, %c0_i32_0, %c0_i32_1 : i32, i32, i32, i32
  }
  func.func @transform_1(%arg0: i32) -> (i32, i32) {
    %c0_i32 = arith.constant 0 : i32
    %c0_i32_0 = arith.constant 0 : i32
    %c0_i32_1 = arith.constant 0 : i32
    return %c0_i32, %c0_i32_0 : i32, i32
  }
  func.func @transform_2(%arg0: i32) -> (i32, i32) {
    %c0_i32 = arith.constant 0 : i32
    %c0_i32_0 = arith.constant 0 : i32
    %c0_i32_1 = arith.constant 0 : i32
    return %c0_i32, %c0_i32_0 : i32, i32
  }
  func.func @transform_3(%arg0: i32) -> (i32, i32, i32) {
    %c0_i32 = arith.constant 0 : i32
    %c0_i32_0 = arith.constant 0 : i32
    %c0_i32_1 = arith.constant 0 : i32
    %c0_i32_2 = arith.constant 0 : i32
    return %c0_i32, %c0_i32_0, %c0_i32_1 : i32, i32, i32
  }
  func.func @transform_4(%arg0: i32) -> (i32, i32, i32) {
    %c0_i32 = arith.constant 0 : i32
    %c0_i32_0 = arith.constant 0 : i32
    %c0_i32_1 = arith.constant 0 : i32
    %c0_i32_2 = arith.constant 0 : i32
    return %c0_i32, %c0_i32_0, %c0_i32_1 : i32, i32, i32
  }
  func.func @transform_5(%arg0: i32) -> (i32, i32) {
    %c0_i32 = arith.constant 0 : i32
    %c0_i32_0 = arith.constant 0 : i32
    %c0_i32_1 = arith.constant 0 : i32
    return %c0_i32, %c0_i32_0 : i32, i32
  }
  func.func @transform_6(%arg0: i32) -> (i32, i32) {
    %c0_i32 = arith.constant 0 : i32
    %c0_i32_0 = arith.constant 0 : i32
    %c0_i32_1 = arith.constant 0 : i32
    return %c0_i32, %c0_i32_0 : i32, i32
  }
  func.func @transform_7(%arg0: i32) -> (i32, i32, i32) {
    %c0_i32 = arith.constant 0 : i32
    %c0_i32_0 = arith.constant 0 : i32
    %c0_i32_1 = arith.constant 0 : i32
    return %arg0, %c0_i32, %c0_i32_0 : i32, i32, i32
  }
}

</mosaic_0001>

<llo_original>
// kernel: bottleneck_pallas.1
$region0: #{bottleneck_pallas.1}
  #allocation0 [shape = 'u32[]', space=smem, size = 0x4, offset = 0x4, fixed_abs, tag = 'smem constant byte address 0x4 - core index']
  #allocation1 [shape = 'u32[144,128]{1,0:T(1,128)}', space=vmem, size = 0x12000, scoped, tag = 'internal scratch']
  #allocation2 [shape = 'f32[18,18,8]{2,1,0:T(8,128)}', space=vmem, size = 0x36000, scoped, tag = 'scratch operand']
  #allocation3 [shape = 'f32[18,18,16]{2,1,0:T(8,128)}', space=vmem, size = 0x36000, scoped, tag = 'scratch operand']
  %s0 = inlined_call_operand.vmem [shape: f32[2,16,16,16], index: 0, kind: input, shape index: {}]
  %s1 = inlined_call_operand.vmem [shape: f32[16,8], index: 1, kind: input, shape index: {}]
  %s2 = inlined_call_operand.vmem [shape: f32[1,8], index: 2, kind: input, shape index: {}]
  %s3 = inlined_call_operand.vmem [shape: f32[3,3,8], index: 3, kind: input, shape index: {}]
  %s4 = inlined_call_operand.vmem [shape: f32[1,1,8], index: 4, kind: input, shape index: {}]
  %s5 = inlined_call_operand.vmem [shape: f32[8,32], index: 5, kind: input, shape index: {}]
  %s6 = inlined_call_operand.vmem [shape: f32[1,32], index: 6, kind: input, shape index: {}]
  %s7 = inlined_call_operand.hbm [shape: f32[2,64,48], index: 7, kind: output, shape index: {}]
  %s8 = sld [smem:[#allocation0]]
  $region61: #{bottleneck_pallas.1} parent=0
    _
  %s10 = ssub.s32 1, %s8
  %s11 = scalar_select 0, %s10, %s8
  $region1: #{bottleneck_pallas.1} parent=0
    #allocation4 [shape = 'u8[65536]{0}', space=vmem, size = 0x10000, scoped, tag = 'output window, operand 0']
    #allocation5 [shape = 's32[2]{0}', space=sflag, size = 0x8, scoped, tag = 'scoped memory for bottleneck_pallas.1']
    %12 = vsyncpa [#allocation5], 0
    %s13 = scalar_lea.sflag [#allocation5], 1
    %14 = vsyncpa %s13, 0
    loop: start=0, step=1, limit=4
    $region2: #{bottleneck_pallas.1} parent=1 // loop_pre_header
      _
    $region3: #{bottleneck_pallas.1} parent=1 // loop_header
      %s16 = sphi 0, %s20
      %p17 = scmp.ge.s32.totalorder %s16, 4
      %s26 = sphi 0, %s28
      %s29 = sphi 0, %s26
      %s30 = sphi 0, %s29
      %s46 = sphi 0, %s30
      %s50 = sphi 0, %s50
      %s52 = sphi 0, %s50
      %s53 = sphi 0, %s52
      %s67 = sphi 0, %s53
      %s71 = sphi 0, %s71
      %s73 = sphi 0, %s71
      %s74 = sphi 0, %s73
      %s88 = sphi 0, %s74
      %s92 = sphi 0, %s92
      %s94 = sphi 0, %s92
      %s95 = sphi 0, %s94
      %s109 = sphi 0, %s95
      %s113 = sphi 0, %s113
      %s115 = sphi 0, %s113
      %s116 = sphi 0, %s115
      %s130 = sphi 0, %s116
      %s134 = sphi 0, %s134
      %s136 = sphi 0, %s134
      %s137 = sphi 0, %s136
      %s151 = sphi 0, %s137
      %s155 = sphi 0, %s155
      %s157 = sphi 0, %s155
      %s158 = sphi 0, %s157
      %s172 = sphi 0, %s158
      %s178 = sphi 0, %s180
      %s181 = sphi 0, %s178
      %s182 = sphi 0, %s181
      %s198 = sphi 0, %s182
    $region4: #{bottleneck_pallas.1} parent=1 // loop_header_branch
      %19 = sbr.rel (%p17) target = $region8
    $region5: #{bottleneck_pallas.1} parent=1 // loop_body
      %s21 = ssub.s32 %s16, 1
      %s22 = ssub.s32 %s16, 2
      %s23 = sadd.s32 %s16, 1
      %s24 = ssub.s32 %s16, %s23
      %p25 = scmp.eq.s32.totalorder %s24, 0
      %s27 = sadd.s32 %s26, 1
      %s28 = scalar_select %p25, %s26, %s27
      %p31 = pneg %p25
      %p32 = scmp.eq.s32.totalorder %s16, 1
      %p33 = por %p31, %p32
      %p34 = scmp.ne.s32.totalorder %s26, %s29
      %p35 = scmp.eq.s32.totalorder %s16, 0
      %p36 = por %p34, %p35
      %p37 = scmp.ne.s32.totalorder %s26, %s29
      %p38 = scmp.eq.s32.totalorder %s21, 1
      %p39 = por %p37, %p38
      %p40 = scmp.ne.s32.totalorder %s29, %s30
      %p41 = scmp.eq.s32.totalorder %s21, 0
      %p42 = por %p40, %p41
      %p43 = scmp.ne.s32.totalorder %s29, %s30
      %p44 = scmp.eq.s32.totalorder %s22, 1
      %p45 = por %p43, %p44
      %p47 = scmp.ne.s32.totalorder %s30, %s46
      %p48 = scmp.eq.s32.totalorder %s22, 0
      %p49 = por %p47, %p48
      %s51 = sadd.s32 %s50, 1
      %p54 = scmp.eq.s32.totalorder %s16, 1
      %p55 = scmp.ne.s32.totalorder %s50, %s52
      %p56 = scmp.eq.s32.totalorder %s16, 0
      %p57 = por %p55, %p56
      %p58 = scmp.ne.s32.totalorder %s50, %s52
      %p59 = scmp.eq.s32.totalorder %s21, 1
      %p60 = por %p58, %p59
      %p61 = scmp.ne.s32.totalorder %s52, %s53
      %p62 = scmp.eq.s32.totalorder %s21, 0
      %p63 = por %p61, %p62
      %p64 = scmp.ne.s32.totalorder %s52, %s53
      %p65 = scmp.eq.s32.totalorder %s22, 1
      %p66 = por %p64, %p65
      %p68 = scmp.ne.s32.totalorder %s53, %s67
      %p69 = scmp.eq.s32.totalorder %s22, 0
      %p70 = por %p68, %p69
      %s72 = sadd.s32 %s71, 1
      %p75 = scmp.eq.s32.totalorder %s16, 1
      %p76 = scmp.ne.s32.totalorder %s71, %s73
      %p77 = scmp.eq.s32.totalorder %s16, 0
      %p78 = por %p76, %p77
      %p79 = scmp.ne.s32.totalorder %s71, %s73
      %p80 = scmp.eq.s32.totalorder %s21, 1
      %p81 = por %p79, %p80
      %p82 = scmp.ne.s32.totalorder %s73, %s74
      %p83 = scmp.eq.s32.totalorder %s21, 0
      %p84 = por %p82, %p83
      %p85 = scmp.ne.s32.totalorder %s73, %s74
      %p86 = scmp.eq.s32.totalorder %s22, 1
      %p87 = por %p85, %p86
      %p89 = scmp.ne.s32.totalorder %s74, %s88
      %p90 = scmp.eq.s32.totalorder %s22, 0
      %p91 = por %p89, %p90
      %s93 = sadd.s32 %s92, 1
      %p96 = scmp.eq.s32.totalorder %s16, 1
      %p97 = scmp.ne.s32.totalorder %s92, %s94
      %p98 = scmp.eq.s32.totalorder %s16, 0
      %p99 = por %p97, %p98
      %p100 = scmp.ne.s32.totalorder %s92, %s94
      %p101 = scmp.eq.s32.totalorder %s21, 1
      %p102 = por %p100, %p101
      %p103 = scmp.ne.s32.totalorder %s94, %s95
      %p104 = scmp.eq.s32.totalorder %s21, 0
      %p105 = por %p103, %p104
      %p106 = scmp.ne.s32.totalorder %s94, %s95
      %p107 = scmp.eq.s32.totalorder %s22, 1
      %p108 = por %p106, %p107
      %p110 = scmp.ne.s32.totalorder %s95, %s109
      %p111 = scmp.eq.s32.totalorder %s22, 0
      %p112 = por %p110, %p111
      %s114 = sadd.s32 %s113, 1
      %p117 = scmp.eq.s32.totalorder %s16, 1
      %p118 = scmp.ne.s32.totalorder %s113, %s115
      %p119 = scmp.eq.s32.totalorder %s16, 0
      %p120 = por %p118, %p119
      %p121 = scmp.ne.s32.totalorder %s113, %s115
      %p122 = scmp.eq.s32.totalorder %s21, 1
      %p123 = por %p121, %p122
      %p124 = scmp.ne.s32.totalorder %s115, %s116
      %p125 = scmp.eq.s32.totalorder %s21, 0
      %p126 = por %p124, %p125
      %p127 = scmp.ne.s32.totalorder %s115, %s116
      %p128 = scmp.eq.s32.totalorder %s22, 1
      %p129 = por %p127, %p128
      %p131 = scmp.ne.s32.totalorder %s116, %s130
      %p132 = scmp.eq.s32.totalorder %s22, 0
      %p133 = por %p131, %p132
      %s135 = sadd.s32 %s134, 1
      %p138 = scmp.eq.s32.totalorder %s16, 1
      %p139 = scmp.ne.s32.totalorder %s134, %s136
      %p140 = scmp.eq.s32.totalorder %s16, 0
      %p141 = por %p139, %p140
      %p142 = scmp.ne.s32.totalorder %s134, %s136
      %p143 = scmp.eq.s32.totalorder %s21, 1
      %p144 = por %p142, %p143
      %p145 = scmp.ne.s32.totalorder %s136, %s137
      %p146 = scmp.eq.s32.totalorder %s21, 0
      %p147 = por %p145, %p146
      %p148 = scmp.ne.s32.totalorder %s136, %s137
      %p149 = scmp.eq.s32.totalorder %s22, 1
      %p150 = por %p148, %p149
      %p152 = scmp.ne.s32.totalorder %s137, %s151
      %p153 = scmp.eq.s32.totalorder %s22, 0
      %p154 = por %p152, %p153
      %s156 = sadd.s32 %s155, 1
      %p159 = scmp.eq.s32.totalorder %s16, 1
      %p160 = scmp.ne.s32.totalorder %s155, %s157
      %p161 = scmp.eq.s32.totalorder %s16, 0
      %p162 = por %p160, %p161
      %p163 = scmp.ne.s32.totalorder %s155, %s157
      %p164 = scmp.eq.s32.totalorder %s21, 1
      %p165 = por %p163, %p164
      %p166 = scmp.ne.s32.totalorder %s157, %s158
      %p167 = scmp.eq.s32.totalorder %s21, 0
      %p168 = por %p166, %p167
      %p169 = scmp.ne.s32.totalorder %s157, %s158
      %p170 = scmp.eq.s32.totalorder %s22, 1
      %p171 = por %p169, %p170
      %p173 = scmp.ne.s32.totalorder %s158, %s172
      %p174 = scmp.eq.s32.totalorder %s22, 0
      %p175 = por %p173, %p174
      %s176 = ssub.s32 %s16, %s23
      %p177 = scmp.eq.s32.totalorder %s176, 0
      %s179 = sadd.s32 %s178, 1
      %s180 = scalar_select %p177, %s178, %s179
      %p183 = pneg %p177
      %p184 = scmp.eq.s32.totalorder %s16, 1
      %p185 = por %p183, %p184
      %p186 = scmp.ne.s32.totalorder %s178, %s181
      %p187 = scmp.eq.s32.totalorder %s16, 0
      %p188 = por %p186, %p187
      %p189 = scmp.ne.s32.totalorder %s178, %s181
      %p190 = scmp.eq.s32.totalorder %s21, 1
      %p191 = por %p189, %p190
      %p192 = scmp.ne.s32.totalorder %s181, %s182
      %p193 = scmp.eq.s32.totalorder %s21, 0
      %p194 = por %p192, %p193
      %p195 = scmp.ne.s32.totalorder %s181, %s182
      %p196 = scmp.eq.s32.totalorder %s22, 1
      %p197 = por %p195, %p196
      %p199 = scmp.ne.s32.totalorder %s182, %s198
      %p200 = scmp.eq.s32.totalorder %s22, 0
      %p201 = por %p199, %p200
      %p202 = scmp.le.s32.totalorder 1, %s16
      %p203 = scmp.lt.s32.totalorder %s16, 3
      %p204 = pnand %p202, %p203
      %p205 = pneg %p204
      // Predicated region
      $region9: #{bottleneck_pallas.1} parent=5 // pred_check
        _
      $region10: #{bottleneck_pallas.1} parent=5 // pred_check_branch
        %207 = sbr.rel (%p204) target = $region12
      $region11: #{bottleneck_pallas.1} parent=5 // pred_region
        %s208 = ssub.s32 %s16, 1
        // Predicated region
        $region13: #{bottleneck_pallas.1} parent=11 // pred_check
          %p209 = pneg %p63
        $region14: #{bottleneck_pallas.1} parent=11 // pred_check_branch
          %211 = sbr.rel (%p209) target = $region16
        $region15: #{bottleneck_pallas.1} parent=11 // pred_region
          _
        $region16: #{bottleneck_pallas.1} parent=11 // pred_fallthru
          _
        // Predicated region
        $region17: #{bottleneck_pallas.1} parent=11 // pred_check
          %p212 = pneg %p84
        $region18: #{bottleneck_pallas.1} parent=11 // pred_check_branch
          %214 = sbr.rel (%p212) target = $region20
        $region19: #{bottleneck_pallas.1} parent=11 // pred_region
          _
        $region20: #{bottleneck_pallas.1} parent=11 // pred_fallthru
          _
        // Predicated region
        $region21: #{bottleneck_pallas.1} parent=11 // pred_check
          %p215 = pneg %p105
        $region22: #{bottleneck_pallas.1} parent=11 // pred_check_branch
          %217 = sbr.rel (%p215) target = $region24
        $region23: #{bottleneck_pallas.1} parent=11 // pred_region
          _
        $region24: #{bottleneck_pallas.1} parent=11 // pred_fallthru
          _
        // Predicated region
        $region25: #{bottleneck_pallas.1} parent=11 // pred_check
          %p218 = pneg %p126
        $region26: #{bottleneck_pallas.1} parent=11 // pred_check_branch
          %220 = sbr.rel (%p218) target = $region28
        $region27: #{bottleneck_pallas.1} parent=11 // pred_region
          _
        $region28: #{bottleneck_pallas.1} parent=11 // pred_fallthru
          _
        // Predicated region
        $region29: #{bottleneck_pallas.1} parent=11 // pred_check
          %p221 = pneg %p147
        $region30: #{bottleneck_pallas.1} parent=11 // pred_check_branch
          %223 = sbr.rel (%p221) target = $region32
        $region31: #{bottleneck_pallas.1} parent=11 // pred_region
          _
        $region32: #{bottleneck_pallas.1} parent=11 // pred_fallthru
          _
        // Predicated region
        $region33: #{bottleneck_pallas.1} parent=11 // pred_check
          %p224 = pneg %p168
        $region34: #{bottleneck_pallas.1} parent=11 // pred_check_branch
          %226 = sbr.rel (%p224) target = $region36
        $region35: #{bottleneck_pallas.1} parent=11 // pred_region
          _
        $region36: #{bottleneck_pallas.1} parent=11 // pred_fallthru
          _
      $region12: #{bottleneck_pallas.1} parent=5 // pred_fallthru
        _
      %p227 = scmp.lt.s32.totalorder %s16, 2
      // Predicated region
      $region37: #{bottleneck_pallas.1} parent=5 // pred_check
        %p228 = pneg %p227
      $region38: #{bottleneck_pallas.1} parent=5 // pred_check_branch
        %230 = sbr.rel (%p228) target = $region40
      $region39: #{bottleneck_pallas.1} parent=5 // pred_region
        // Predicated region
        $region41: #{bottleneck_pallas.1} parent=39 // pred_check
          %p231 = pneg %p36
        $region42: #{bottleneck_pallas.1} parent=39 // pred_check_branch
          %233 = sbr.rel (%p231) target = $region44
        $region43: #{bottleneck_pallas.1} parent=39 // pred_region
          %p234 = scmp.lt.s32.totalorder %s16, 1
          %s235 = scalar_select %p234, %s16, 1
          %s236 = smul.addr %s235, 32
          %s237 = smul.addr %s236, 8
          %s238 = scalar_lea.vmem %s0, %s237
        $region44: #{bottleneck_pallas.1} parent=39 // pred_fallthru
          _
      $region40: #{bottleneck_pallas.1} parent=5 // pred_fallthru
        _
      %p239 = scmp.le.s32.totalorder 1, %s16
      %p240 = scmp.lt.s32.totalorder %s16, 3
      %p241 = pnand %p239, %p240
      %p242 = pneg %p241
      // Predicated region
      $region45: #{bottleneck_pallas.1} parent=5 // pred_check
        _
      $region46: #{bottleneck_pallas.1} parent=5 // pred_check_branch
        %244 = sbr.rel (%p241) target = $region48
      $region47: #{bottleneck_pallas.1} parent=5 // pred_region
        %s245 = ssub.s32 %s16, 1
        %p246 = scmp.lt.s32.totalorder %s21, 1
        %s247 = scalar_select %p246, %s21, 1
        %s248 = smul.addr %s247, 32
        %s249 = smul.addr %s248, 8
        %s250 = scalar_lea.vmem %s0, %s249
        %p251 = pneg %p42
        %p252 = pneg %p39
        %p253 = pneg %p63
        %p254 = pneg %p60
        %p255 = pneg %p84
        %p256 = pneg %p81
        %p257 = pneg %p105
        %p258 = pneg %p102
        %p259 = pneg %p126
        %p260 = pneg %p123
        %p261 = pneg %p147
        %p262 = pneg %p144
        %p263 = pneg %p168
        %p264 = pneg %p165
        %p265 = pneg %p194
        %p266 = pneg %p191
        %s267 = sand.u32 %s181, 1
        %s268 = scalar_lea.sflag [#allocation5], %s267
        %s269 = sand.u32 %s181, 1
        %s270 = smul.addr %s269, 64
        %s271 = scalar_lea.vmem [#allocation4], %s270
        %p272 = scmp.lt.s32.totalorder %s21, 1
        %s273 = scalar_select %p272, %s21, 1
        %s274 = smul.addr %s273, 32
        %s275 = smul.addr %s274, 8
        %s276 = scalar_lea.vmem %s0, %s275
        %v277 = vld [vmem:[%s276] sm:$0xff]
        %v278 = vld [vmem:[%s276 + $0x8] sm:$0xff]
        %v279 = vld [vmem:[%s276 + $0x10] sm:$0xff]
        %v280 = vld [vmem:[%s276 + $0x18] sm:$0xff]
        %v281 = vld [vmem:[%s276 + $0x20] sm:$0xff]
        %v282 = vld [vmem:[%s276 + $0x28] sm:$0xff]
        %v283 = vld [vmem:[%s276 + $0x30] sm:$0xff]
        %v284 = vld [vmem:[%s276 + $0x38] sm:$0xff]
        %v285 = vld [vmem:[%s276 + $0x40] sm:$0xff]
        %v286 = vld [vmem:[%s276 + $0x48] sm:$0xff]
        %v287 = vld [vmem:[%s276 + $0x50] sm:$0xff]
        %v288 = vld [vmem:[%s276 + $0x58] sm:$0xff]
        %v289 = vld [vmem:[%s276 + $0x60] sm:$0xff]
        %v290 = vld [vmem:[%s276 + $0x68] sm:$0xff]
        %v291 = vld [vmem:[%s276 + $0x70] sm:$0xff]
        %v292 = vld [vmem:[%s276 + $0x78] sm:$0xff]
        %v293 = vld [vmem:[%s276 + $0x80] sm:$0xff]
        %v294 = vld [vmem:[%s276 + $0x88] sm:$0xff]
        %v295 = vld [vmem:[%s276 + $0x90] sm:$0xff]
        %v296 = vld [vmem:[%s276 + $0x98] sm:$0xff]
        %v297 = vld [vmem:[%s276 + $0xa0] sm:$0xff]
        %v298 = vld [vmem:[%s276 + $0xa8] sm:$0xff]
        %v299 = vld [vmem:[%s276 + $0xb0] sm:$0xff]
        %v300 = vld [vmem:[%s276 + $0xb8] sm:$0xff]
        %v301 = vld [vmem:[%s276 + $0xc0] sm:$0xff]
        %v302 = vld [vmem:[%s276 + $0xc8] sm:$0xff]
        %v303 = vld [vmem:[%s276 + $0xd0] sm:$0xff]
        %v304 = vld [vmem:[%s276 + $0xd8] sm:$0xff]
        %v305 = vld [vmem:[%s276 + $0xe0] sm:$0xff]
        %v306 = vld [vmem:[%s276 + $0xe8] sm:$0xff]
        %v307 = vld [vmem:[%s276 + $0xf0] sm:$0xff]
        %v308 = vld [vmem:[%s276 + $0xf8] sm:$0xff]
        %v309 = vld [vmem:[%s1] sm:$0xff]
        %v310 = vld [vmem:[%s1 + $0x8] sm:$0xff]
        %v311 = vld [vmem:[%s2] sm:$0x1]
        %v313 = vlaneseq
        %v314 = vshrl.u32 %v313, 7
        %v315 = vsub.s32 0, %v314
        %v316 = vrot.slane %v311, %v315
        %vm318 = vcmask 130048
        %v320 = vsel %vm318, %v277, 0
        %v323 = vsel %vm318, %v278, 0
        %v326 = vsel %vm318, %v279, 0
        %v329 = vsel %vm318, %v280, 0
        %v332 = vsel %vm318, %v281, 0
        %v335 = vsel %vm318, %v282, 0
        %v338 = vsel %vm318, %v283, 0
        %v341 = vsel %vm318, %v284, 0
        %v344 = vsel %vm318, %v285, 0
        %v347 = vsel %vm318, %v286, 0
        %v350 = vsel %vm318, %v287, 0
        %v353 = vsel %vm318, %v288, 0
        %v356 = vsel %vm318, %v289, 0
        %v359 = vsel %vm318, %v290, 0
        %v362 = vsel %vm318, %v291, 0
        %v365 = vsel %vm318, %v292, 0
        %v368 = vsel %vm318, %v293, 0
        %v371 = vsel %vm318, %v294, 0
        %v374 = vsel %vm318, %v295, 0
        %v377 = vsel %vm318, %v296, 0
        %v380 = vsel %vm318, %v297, 0
        %v383 = vsel %vm318, %v298, 0
        %v386 = vsel %vm318, %v299, 0
        %v389 = vsel %vm318, %v300, 0
        %v392 = vsel %vm318, %v301, 0
        %v395 = vsel %vm318, %v302, 0
        %v398 = vsel %vm318, %v303, 0
        %v401 = vsel %vm318, %v304, 0
        %v404 = vsel %vm318, %v305, 0
        %v407 = vsel %vm318, %v306, 0
        %v410 = vsel %vm318, %v307, 0
        %v413 = vsel %vm318, %v308, 0
        %415 = vmatprep.subr.mxu0 0.0
        %416 = vmatpush1.msra.mxu0 %v309
        %417 = vmatprep.subr.mxu0 0.0
        %418 = vmatpush1.msra.mxu0 %v310
        %419 = vmatprep.subr.mxu0 0.0
        %420 = vmatpush1.msra.mxu0 0.0
        %421 = vmatprep.subr.mxu0 0.0
        %422 = vmatpush1.msra.mxu0 0.0
        %423 = vmatprep.subr.mxu0 0.0
        %424 = vmatpush1.msra.mxu0 0.0
        %425 = vmatprep.subr.mxu0 0.0
        %426 = vmatpush1.msra.mxu0 0.0
        %427 = vmatprep.subr.mxu0 0.0
        %428 = vmatpush1.msra.mxu0 0.0
        %429 = vmatprep.subr.mxu0 0.0
        %430 = vmatpush1.msra.mxu0 0.0
        %431 = vmatprep.subr.mxu0 0.0
        %432 = vmatpush1.msra.mxu0 0.0
        %433 = vmatprep.subr.mxu0 0.0
        %434 = vmatpush1.msra.mxu0 0.0
        %435 = vmatprep.subr.mxu0 0.0
        %436 = vmatpush1.msra.mxu0 0.0
        %437 = vmatprep.subr.mxu0 0.0
        %438 = vmatpush1.msra.mxu0 0.0
        %439 = vmatprep.subr.mxu0 0.0
        %440 = vmatpush1.msra.mxu0 0.0
        %441 = vmatprep.subr.mxu0 0.0
        %442 = vmatpush1.msra.mxu0 0.0
        %443 = vmatprep.subr.mxu0 0.0
        %444 = vmatpush1.msra.mxu0 0.0
        %445 = vmatprep.subr.mxu0 0.0
        %446 = vmatpush1.msra.mxu0 0.0
        %447 = vmatprep.subr.mxu0 0.0
        %448 = vmatpush1.msra.mxu0 0.0
        %449 = vmatprep.subr.mxu0 0.0
        %450 = vmatpush1.msra.mxu0 0.0
        %451 = vmatprep.subr.mxu0 0.0
        %452 = vmatpush1.msra.mxu0 0.0
        %453 = vmatprep.subr.mxu0 0.0
        %454 = vmatpush1.msra.mxu0 0.0
        %455 = vmatprep.subr.mxu0 0.0
        %456 = vmatpush1.msra.mxu0 0.0
        %457 = vmatprep.subr.mxu0 0.0
        %458 = vmatpush1.msra.mxu0 0.0
        %459 = vmatprep.subr.mxu0 0.0
        %460 = vmatpush1.msra.mxu0 0.0
        %461 = vmatprep.subr.mxu0 0.0
        %462 = vmatpush1.msra.mxu0 0.0
        %463 = vmatprep.subr.mxu0 0.0
        %464 = vmatpush1.msra.mxu0 0.0
        %465 = vmatprep.subr.mxu0 0.0
        %466 = vmatpush1.msra.mxu0 0.0
        %467 = vmatprep.subr.mxu0 0.0
        %468 = vmatpush1.msra.mxu0 0.0
        %469 = vmatprep.subr.mxu0 0.0
        %470 = vmatpush1.msra.mxu0 0.0
        %471 = vmatprep.subr.mxu0 0.0
        %472 = vmatpush1.msra.mxu0 0.0
        %473 = vmatprep.subr.mxu0 0.0
        %474 = vmatpush1.msra.mxu0 0.0
        %475 = vmatprep.subr.mxu0 0.0
        %476 = vmatpush1.msra.mxu0 0.0
        %477 = vmatprep.subr.mxu0 0.0
        %478 = vmatpush1.msra.mxu0 0.0
        %479 = vmatprep.mubr.f32.mxu0 0.0
        %480 = vmatmul.mubr.f32.gmra.mrb[0].mxu0 %v320
        %v481 = vpop.f32.mrb[0].mxu0
        %v482 = vadd.f32 %v316, %v481
        %v483 = vpop.f32.mrb[0].mxu0
        %484 = vmatprep.mubr.f32.mxu0 0.0
        %485 = vmatmul.mubr.f32.gmra.mrb[0].mxu0 %v323
        %v486 = vpop.f32.mrb[0].mxu0
        %v487 = vadd.f32 %v316, %v486
        %v488 = vpop.f32.mrb[0].mxu0
        %489 = vmatprep.mubr.f32.mxu0 0.0
        %490 = vmatmul.mubr.f32.gmra.mrb[0].mxu0 %v326
        %v491 = vpop.f32.mrb[0].mxu0
        %v492 = vadd.f32 %v316, %v491
        %v493 = vpop.f32.mrb[0].mxu0
        %494 = vmatprep.mubr.f32.mxu0 0.0
        %495 = vmatmul.mubr.f32.gmra.mrb[0].mxu0 %v329
        %v496 = vpop.f32.mrb[0].mxu0
        %v497 = vadd.f32 %v316, %v496
        %v498 = vpop.f32.mrb[0].mxu0
        %499 = vmatprep.mubr.f32.mxu0 0.0
        %500 = vmatmul.mubr.f32.gmra.mrb[0].mxu0 %v332
        %v501 = vpop.f32.mrb[0].mxu0
        %v502 = vadd.f32 %v316, %v501
        %v503 = vpop.f32.mrb[0].mxu0
        %504 = vmatprep.mubr.f32.mxu0 0.0
        %505 = vmatmul.mubr.f32.gmra.mrb[0].mxu0 %v335
        %v506 = vpop.f32.mrb[0].mxu0
        %v507 = vadd.f32 %v316, %v506
        %v508 = vpop.f32.mrb[0].mxu0
        %509 = vmatprep.mubr.f32.mxu0 0.0
        %510 = vmatmul.mubr.f32.gmra.mrb[0].mxu0 %v338
        %v511 = vpop.f32.mrb[0].mxu0
        %v512 = vadd.f32 %v316, %v511
        %v513 = vpop.f32.mrb[0].mxu0
        %514 = vmatprep.mubr.f32.mxu0 0.0
        %515 = vmatmul.mubr.f32.gmra.mrb[0].mxu0 %v341
        %v516 = vpop.f32.mrb[0].mxu0
        %v517 = vadd.f32 %v316, %v516
        %v518 = vpop.f32.mrb[0].mxu0
        %519 = vmatprep.mubr.f32.mxu0 0.0
        %520 = vmatmul.mubr.f32.gmra.mrb[0].mxu0 %v344
        %v521 = vpop.f32.mrb[0].mxu0
        %v522 = vadd.f32 %v316, %v521
        %v523 = vpop.f32.mrb[0].mxu0
        %524 = vmatprep.mubr.f32.mxu0 0.0
        %525 = vmatmul.mubr.f32.gmra.mrb[0].mxu0 %v347
        %v526 = vpop.f32.mrb[0].mxu0
        %v527 = vadd.f32 %v316, %v526
        %v528 = vpop.f32.mrb[0].mxu0
        %529 = vmatprep.mubr.f32.mxu0 0.0
        %530 = vmatmul.mubr.f32.gmra.mrb[0].mxu0 %v350
        %v531 = vpop.f32.mrb[0].mxu0
        %v532 = vadd.f32 %v316, %v531
        %v533 = vpop.f32.mrb[0].mxu0
        %534 = vmatprep.mubr.f32.mxu0 0.0
        %535 = vmatmul.mubr.f32.gmra.mrb[0].mxu0 %v353
        %v536 = vpop.f32.mrb[0].mxu0
        %v537 = vadd.f32 %v316, %v536
        %v538 = vpop.f32.mrb[0].mxu0
        %539 = vmatprep.mubr.f32.mxu0 0.0
        %540 = vmatmul.mubr.f32.gmra.mrb[0].mxu0 %v356
        %v541 = vpop.f32.mrb[0].mxu0
        %v542 = vadd.f32 %v316, %v541
        %v543 = vpop.f32.mrb[0].mxu0
        %544 = vmatprep.mubr.f32.mxu0 0.0
        %545 = vmatmul.mubr.f32.gmra.mrb[0].mxu0 %v359
        %v546 = vpop.f32.mrb[0].mxu0
        %v547 = vadd.f32 %v316, %v546
        %v548 = vpop.f32.mrb[0].mxu0
        %549 = vmatprep.mubr.f32.mxu0 0.0
        %550 = vmatmul.mubr.f32.gmra.mrb[0].mxu0 %v362
        %v551 = vpop.f32.mrb[0].mxu0
        %v552 = vadd.f32 %v316, %v551
        %v553 = vpop.f32.mrb[0].mxu0
        %554 = vmatprep.mubr.f32.mxu0 0.0
        %555 = vmatmul.mubr.f32.gmra.mrb[0].mxu0 %v365
        %v556 = vpop.f32.mrb[0].mxu0
        %v557 = vadd.f32 %v316, %v556
        %v558 = vpop.f32.mrb[0].mxu0
        %559 = vmatprep.mubr.f32.mxu0 0.0
        %560 = vmatmul.mubr.f32.gmra.mrb[0].mxu0 %v368
        %v561 = vpop.f32.mrb[0].mxu0
        %v562 = vadd.f32 %v316, %v561
        %v563 = vpop.f32.mrb[0].mxu0
        %564 = vmatprep.mubr.f32.mxu0 0.0
        %565 = vmatmul.mubr.f32.gmra.mrb[0].mxu0 %v371
        %v566 = vpop.f32.mrb[0].mxu0
        %v567 = vadd.f32 %v316, %v566
        %v568 = vpop.f32.mrb[0].mxu0
        %569 = vmatprep.mubr.f32.mxu0 0.0
        %570 = vmatmul.mubr.f32.gmra.mrb[0].mxu0 %v374
        %v571 = vpop.f32.mrb[0].mxu0
        %v572 = vadd.f32 %v316, %v571
        %v573 = vpop.f32.mrb[0].mxu0
        %574 = vmatprep.mubr.f32.mxu0 0.0
        %575 = vmatmul.mubr.f32.gmra.mrb[0].mxu0 %v377
        %v576 = vpop.f32.mrb[0].mxu0
        %v577 = vadd.f32 %v316, %v576
        %v578 = vpop.f32.mrb[0].mxu0
        %579 = vmatprep.mubr.f32.mxu0 0.0
        %580 = vmatmul.mubr.f32.gmra.mrb[0].mxu0 %v380
        %v581 = vpop.f32.mrb[0].mxu0
        %v582 = vadd.f32 %v316, %v581
        %v583 = vpop.f32.mrb[0].mxu0
        %584 = vmatprep.mubr.f32.mxu0 0.0
        %585 = vmatmul.mubr.f32.gmra.mrb[0].mxu0 %v383
        %v586 = vpop.f32.mrb[0].mxu0
        %v587 = vadd.f32 %v316, %v586
        %v588 = vpop.f32.mrb[0].mxu0
        %589 = vmatprep.mubr.f32.mxu0 0.0
        %590 = vmatmul.mubr.f32.gmra.mrb[0].mxu0 %v386
        %v591 = vpop.f32.mrb[0].mxu0
        %v592 = vadd.f32 %v316, %v591
        %v593 = vpop.f32.mrb[0].mxu0
        %594 = vmatprep.mubr.f32.mxu0 0.0
        %595 = vmatmul.mubr.f32.gmra.mrb[0].mxu0 %v389
        %v596 = vpop.f32.mrb[0].mxu0
        %v597 = vadd.f32 %v316, %v596
        %v598 = vpop.f32.mrb[0].mxu0
        %599 = vmatprep.mubr.f32.mxu0 0.0
        %600 = vmatmul.mubr.f32.gmra.mrb[0].mxu0 %v392
        %v601 = vpop.f32.mrb[0].mxu0
        %v602 = vadd.f32 %v316, %v601
        %v603 = vpop.f32.mrb[0].mxu0
        %604 = vmatprep.mubr.f32.mxu0 0.0
        %605 = vmatmul.mubr.f32.gmra.mrb[0].mxu0 %v395
        %v606 = vpop.f32.mrb[0].mxu0
        %v607 = vadd.f32 %v316, %v606
        %v608 = vpop.f32.mrb[0].mxu0
        %609 = vmatprep.mubr.f32.mxu0 0.0
        %610 = vmatmul.mubr.f32.gmra.mrb[0].mxu0 %v398
        %v611 = vpop.f32.mrb[0].mxu0
        %v612 = vadd.f32 %v316, %v611
        %v613 = vpop.f32.mrb[0].mxu0
        %614 = vmatprep.mubr.f32.mxu0 0.0
        %615 = vmatmul.mubr.f32.gmra.mrb[0].mxu0 %v401
        %v616 = vpop.f32.mrb[0].mxu0
        %v617 = vadd.f32 %v316, %v616
        %v618 = vpop.f32.mrb[0].mxu0
        %619 = vmatprep.mubr.f32.mxu0 0.0
        %620 = vmatmul.mubr.f32.gmra.mrb[0].mxu0 %v404
        %v621 = vpop.f32.mrb[0].mxu0
        %v622 = vadd.f32 %v316, %v621
        %v623 = vpop.f32.mrb[0].mxu0
        %624 = vmatprep.mubr.f32.mxu0 0.0
        %625 = vmatmul.mubr.f32.gmra.mrb[0].mxu0 %v407
        %v626 = vpop.f32.mrb[0].mxu0
        %v627 = vadd.f32 %v316, %v626
        %v628 = vpop.f32.mrb[0].mxu0
        %629 = vmatprep.mubr.f32.mxu0 0.0
        %630 = vmatmul.mubr.f32.gmra.mrb[0].mxu0 %v410
        %v631 = vpop.f32.mrb[0].mxu0
        %v632 = vadd.f32 %v316, %v631
        %v633 = vpop.f32.mrb[0].mxu0
        %634 = vmatprep.mubr.f32.mxu0 0.0
        %635 = vmatmul.mubr.f32.gmra.mrb[0].mxu0 %v413
        %v636 = vpop.f32.mrb[0].mxu0
        %v637 = vadd.f32 %v316, %v636
        %v638 = vpop.f32.mrb[0].mxu0
        %639 = vdwg.mxu0
        %v640 = vmax.f32 %v482, 0.0
        %v641 = vmax.f32 %v487, 0.0
        %v642 = vmax.f32 %v492, 0.0
        %v643 = vmax.f32 %v497, 0.0
        %v644 = vmax.f32 %v502, 0.0
        %v645 = vmax.f32 %v507, 0.0
        %v646 = vmax.f32 %v512, 0.0
        %v647 = vmax.f32 %v517, 0.0
        %v648 = vmax.f32 %v522, 0.0
        %v649 = vmax.f32 %v527, 0.0
        %v650 = vmax.f32 %v532, 0.0
        %v651 = vmax.f32 %v537, 0.0
        %v652 = vmax.f32 %v542, 0.0
        %v653 = vmax.f32 %v547, 0.0
        %v654 = vmax.f32 %v552, 0.0
        %v655 = vmax.f32 %v557, 0.0
        %v656 = vmax.f32 %v562, 0.0
        %v657 = vmax.f32 %v567, 0.0
        %v658 = vmax.f32 %v572, 0.0
        %v659 = vmax.f32 %v577, 0.0
        %v660 = vmax.f32 %v582, 0.0
        %v661 = vmax.f32 %v587, 0.0
        %v662 = vmax.f32 %v592, 0.0
        %v663 = vmax.f32 %v597, 0.0
        %v664 = vmax.f32 %v602, 0.0
        %v665 = vmax.f32 %v607, 0.0
        %v666 = vmax.f32 %v612, 0.0
        %v667 = vmax.f32 %v617, 0.0
        %v668 = vmax.f32 %v622, 0.0
        %v669 = vmax.f32 %v627, 0.0
        %v670 = vmax.f32 %v632, 0.0
        %v671 = vmax.f32 %v637, 0.0
        %vm672 = vcmask 64512
        %673 = vst.msk [vmem:[#allocation2] sm:$0xff] %vm672, 0.0
        %674 = vst.msk [vmem:[#allocation2 + $0x8] sm:$0xff] %vm672, 0.0
        %vm675 = vcmask 58368
        %676 = vst.msk [vmem:[#allocation2 + $0x10] sm:$0x3] %vm675, 0.0
        %677 = vst.msk [vmem:[#allocation2 + $0x18] sm:$0xff] %vm672, 0.0
        %678 = vst.msk [vmem:[#allocation2 + $0x20] sm:$0xff] %vm672, 0.0
        %679 = vst.msk [vmem:[#allocation2 + $0x28] sm:$0x3] %vm675, 0.0
        %680 = vst.msk [vmem:[#allocation2 + $0x30] sm:$0xff] %vm672, 0.0
        %681 = vst.msk [vmem:[#allocation2 + $0x38] sm:$0xff] %vm672, 0.0
        %682 = vst.msk [vmem:[#allocation2 + $0x40] sm:$0x3] %vm675, 0.0
        %683 = vst.msk [vmem:[#allocation2 + $0x48] sm:$0xff] %vm672, 0.0
        %684 = vst.msk [vmem:[#allocation2 + $0x50] sm:$0xff] %vm672, 0.0
        %685 = vst.msk [vmem:[#allocation2 + $0x58] sm:$0x3] %vm675, 0.0
        %686 = vst.msk [vmem:[#allocation2 + $0x60] sm:$0xff] %vm672, 0.0
        %687 = vst.msk [vmem:[#allocation2 + $0x68] sm:$0xff] %vm672, 0.0
        %688 = vst.msk [vmem:[#allocation2 + $0x70] sm:$0x3] %vm675, 0.0
        %689 = vst.msk [vmem:[#allocation2 + $0x78] sm:$0xff] %vm672, 0.0
        %690 = vst.msk [vmem:[#allocation2 + $0x80] sm:$0xff] %vm672, 0.0
        %691 = vst.msk [vmem:[#allocation2 + $0x88] sm:$0x3] %vm675, 0.0
        %692 = vst.msk [vmem:[#allocation2 + $0x90] sm:$0xff] %vm672, 0.0
        %693 = vst.msk [vmem:[#allocation2 + $0x98] sm:$0xff] %vm672, 0.0
        %694 = vst.msk [vmem:[#allocation2 + $0xa0] sm:$0x3] %vm675, 0.0
        %695 = vst.msk [vmem:[#allocation2 + $0xa8] sm:$0xff] %vm672, 0.0
        %696 = vst.msk [vmem:[#allocation2 + $0xb0] sm:$0xff] %vm672, 0.0
        %697 = vst.msk [vmem:[#allocation2 + $0xb8] sm:$0x3] %vm675, 0.0
        %698 = vst.msk [vmem:[#allocation2 + $0xc0] sm:$0xff] %vm672, 0.0
        %699 = vst.msk [vmem:[#allocation2 + $0xc8] sm:$0xff] %vm672, 0.0
        %700 = vst.msk [vmem:[#allocation2 + $0xd0] sm:$0x3] %vm675, 0.0
        %701 = vst.msk [vmem:[#allocation2 + $0xd8] sm:$0xff] %vm672, 0.0
        %702 = vst.msk [vmem:[#allocation2 + $0xe0] sm:$0xff] %vm672, 0.0
        %703 = vst.msk [vmem:[#allocation2 + $0xe8] sm:$0x3] %vm675, 0.0
        %704 = vst.msk [vmem:[#allocation2 + $0xf0] sm:$0xff] %vm672, 0.0
        %705 = vst.msk [vmem:[#allocation2 + $0xf8] sm:$0xff] %vm672, 0.0
        %706 = vst.msk [vmem:[#allocation2 + $0x100] sm:$0x3] %vm675, 0.0
        %707 = vst.msk [vmem:[#allocation2 + $0x108] sm:$0xff] %vm672, 0.0
        %708 = vst.msk [vmem:[#allocation2 + $0x110] sm:$0xff] %vm672, 0.0
        %709 = vst.msk [vmem:[#allocation2 + $0x118] sm:$0x3] %vm675, 0.0
        %710 = vst.msk [vmem:[#allocation2 + $0x120] sm:$0xff] %vm672, 0.0
        %711 = vst.msk [vmem:[#allocation2 + $0x128] sm:$0xff] %vm672, 0.0
        %712 = vst.msk [vmem:[#allocation2 + $0x130] sm:$0x3] %vm675, 0.0
        %713 = vst.msk [vmem:[#allocation2 + $0x138] sm:$0xff] %vm672, 0.0
        %714 = vst.msk [vmem:[#allocation2 + $0x140] sm:$0xff] %vm672, 0.0
        %715 = vst.msk [vmem:[#allocation2 + $0x148] sm:$0x3] %vm675, 0.0
        %716 = vst.msk [vmem:[#allocation2 + $0x150] sm:$0xff] %vm672, 0.0
        %717 = vst.msk [vmem:[#allocation2 + $0x158] sm:$0xff] %vm672, 0.0
        %718 = vst.msk [vmem:[#allocation2 + $0x160] sm:$0x3] %vm675, 0.0
        %719 = vst.msk [vmem:[#allocation2 + $0x168] sm:$0xff] %vm672, 0.0
        %720 = vst.msk [vmem:[#allocation2 + $0x170] sm:$0xff] %vm672, 0.0
        %721 = vst.msk [vmem:[#allocation2 + $0x178] sm:$0x3] %vm675, 0.0
        %722 = vst.msk [vmem:[#allocation2 + $0x180] sm:$0xff] %vm672, 0.0
        %723 = vst.msk [vmem:[#allocation2 + $0x188] sm:$0xff] %vm672, 0.0
        %724 = vst.msk [vmem:[#allocation2 + $0x190] sm:$0x3] %vm675, 0.0
        %725 = vst.msk [vmem:[#allocation2 + $0x198] sm:$0xff] %vm672, 0.0
        %726 = vst.msk [vmem:[#allocation2 + $0x1a0] sm:$0xff] %vm672, 0.0
        %727 = vst.msk [vmem:[#allocation2 + $0x1a8] sm:$0x3] %vm675, 0.0
        %s728 = scalar_lea.vmem [#allocation2], 24
        %729 = vst.msk [vmem:[%s728 + $0x1] sm:$0xff] %vm672, %v640
        %730 = vst.msk [vmem:[%s728 + $0x9] sm:$0xff] %vm672, %v641
        %731 = vst.msk [vmem:[%s728 + $0x19] sm:$0xff] %vm672, %v642
        %732 = vst.msk [vmem:[%s728 + $0x21] sm:$0xff] %vm672, %v643
        %733 = vst.msk [vmem:[%s728 + $0x31] sm:$0xff] %vm672, %v644
        %734 = vst.msk [vmem:[%s728 + $0x39] sm:$0xff] %vm672, %v645
        %735 = vst.msk [vmem:[%s728 + $0x49] sm:$0xff] %vm672, %v646
        %736 = vst.msk [vmem:[%s728 + $0x51] sm:$0xff] %vm672, %v647
        %737 = vst.msk [vmem:[%s728 + $0x61] sm:$0xff] %vm672, %v648
        %738 = vst.msk [vmem:[%s728 + $0x69] sm:$0xff] %vm672, %v649
        %739 = vst.msk [vmem:[%s728 + $0x79] sm:$0xff] %vm672, %v650
        %740 = vst.msk [vmem:[%s728 + $0x81] sm:$0xff] %vm672, %v651
        %741 = vst.msk [vmem:[%s728 + $0x91] sm:$0xff] %vm672, %v652
        %742 = vst.msk [vmem:[%s728 + $0x99] sm:$0xff] %vm672, %v653
        %743 = vst.msk [vmem:[%s728 + $0xa9] sm:$0xff] %vm672, %v654
        %744 = vst.msk [vmem:[%s728 + $0xb1] sm:$0xff] %vm672, %v655
        %745 = vst.msk [vmem:[%s728 + $0xc1] sm:$0xff] %vm672, %v656
        %746 = vst.msk [vmem:[%s728 + $0xc9] sm:$0xff] %vm672, %v657
        %747 = vst.msk [vmem:[%s728 + $0xd9] sm:$0xff] %vm672, %v658
        %748 = vst.msk [vmem:[%s728 + $0xe1] sm:$0xff] %vm672, %v659
        %749 = vst.msk [vmem:[%s728 + $0xf1] sm:$0xff] %vm672, %v660
        %750 = vst.msk [vmem:[%s728 + $0xf9] sm:$0xff] %vm672, %v661
        %751 = vst.msk [vmem:[%s728 + $0x109] sm:$0xff] %vm672, %v662
        %752 = vst.msk [vmem:[%s728 + $0x111] sm:$0xff] %vm672, %v663
        %753 = vst.msk [vmem:[%s728 + $0x121] sm:$0xff] %vm672, %v664
        %754 = vst.msk [vmem:[%s728 + $0x129] sm:$0xff] %vm672, %v665
        %755 = vst.msk [vmem:[%s728 + $0x139] sm:$0xff] %vm672, %v666
        %756 = vst.msk [vmem:[%s728 + $0x141] sm:$0xff] %vm672, %v667
        %757 = vst.msk [vmem:[%s728 + $0x151] sm:$0xff] %vm672, %v668
        %758 = vst.msk [vmem:[%s728 + $0x159] sm:$0xff] %vm672, %v669
        %759 = vst.msk [vmem:[%s728 + $0x169] sm:$0xff] %vm672, %v670
        %760 = vst.msk [vmem:[%s728 + $0x171] sm:$0xff] %vm672, %v671
        %v761 = vld [vmem:[%s3] sm:$0x7]
        %v762 = vld [vmem:[%s3 + $0x4] sm:$0x7]
        %v763 = vld [vmem:[%s3 + $0x8] sm:$0x7]
        %v764 = vld [vmem:[#allocation2] ss:$2 sm:$0xff]
        %s765 = scalar_lea.vmem [#allocation2], 48
        %v766 = vld [vmem:[%s765] ss:$2 sm:$0xff]
        %s767 = scalar_lea.vmem [#allocation2], 96
        %v768 = vld [vmem:[%s767] ss:$2 sm:$0xff]
        %s769 = scalar_lea.vmem [#allocation2], 144
        %v770 = vld [vmem:[%s769] ss:$2 sm:$0xff]
        %s771 = scalar_lea.vmem [#allocation2], 192
        %v772 = vld [vmem:[%s771] ss:$2 sm:$0xff]
        %s773 = scalar_lea.vmem [#allocation2], 240
        %v774 = vld [vmem:[%s773] ss:$2 sm:$0xff]
        %s775 = scalar_lea.vmem [#allocation2], 288
        %v776 = vld [vmem:[%s775] ss:$2 sm:$0xff]
        %s777 = scalar_lea.vmem [#allocation2], 336
        %v778 = vld [vmem:[%s777] ss:$2 sm:$0xff]
        %v779 = vlaneseq
        %v780 = vshrl.u32 %v779, 7
        %v781 = vsub.s32 0, %v780
        %v782 = vrot.slane %v761, %v781
        %v783 = vmul.f32 %v764, %v782
        %v784 = vmul.f32 %v766, %v782
        %v785 = vmul.f32 %v768, %v782
        %v786 = vmul.f32 %v770, %v782
        %v787 = vmul.f32 %v772, %v782
        %v788 = vmul.f32 %v774, %v782
        %v789 = vmul.f32 %v776, %v782
        %v790 = vmul.f32 %v778, %v782
        %v791 = vadd.f32 %v783, 0.0
        %v792 = vadd.f32 %v784, 0.0
        %v793 = vadd.f32 %v785, 0.0
        %v794 = vadd.f32 %v786, 0.0
        %v795 = vadd.f32 %v787, 0.0
        %v796 = vadd.f32 %v788, 0.0
        %v797 = vadd.f32 %v789, 0.0
        %v798 = vadd.f32 %v790, 0.0
        %s799 = scalar_lea.vmem [#allocation2], 1
        %v800 = vld [vmem:[%s799] ss:$2 sm:$0xff]
        %s801 = scalar_lea.vmem [#allocation2], 49
        %v802 = vld [vmem:[%s801] ss:$2 sm:$0xff]
        %s803 = scalar_lea.vmem [#allocation2], 97
        %v804 = vld [vmem:[%s803] ss:$2 sm:$0xff]
        %s805 = scalar_lea.vmem [#allocation2], 145
        %v806 = vld [vmem:[%s805] ss:$2 sm:$0xff]
        %s807 = scalar_lea.vmem [#allocation2], 193
        %v808 = vld [vmem:[%s807] ss:$2 sm:$0xff]
        %s809 = scalar_lea.vmem [#allocation2], 241
        %v810 = vld [vmem:[%s809] ss:$2 sm:$0xff]
        %s811 = scalar_lea.vmem [#allocation2], 289
        %v812 = vld [vmem:[%s811] ss:$2 sm:$0xff]
        %s813 = scalar_lea.vmem [#allocation2], 337
        %v814 = vld [vmem:[%s813] ss:$2 sm:$0xff]
        %v815 = vlaneseq
        %v816 = vshrl.u32 %v815, 7
        %v817 = vsub.s32 1, %v816
        %v818 = vrot.slane %v761, %v817
        %v819 = vmul.f32 %v800, %v818
        %v820 = vmul.f32 %v802, %v818
        %v821 = vmul.f32 %v804, %v818
        %v822 = vmul.f32 %v806, %v818
        %v823 = vmul.f32 %v808, %v818
        %v824 = vmul.f32 %v810, %v818
        %v825 = vmul.f32 %v812, %v818
        %v826 = vmul.f32 %v814, %v818
        %v827 = vadd.f32 %v791, %v819
        %v828 = vadd.f32 %v792, %v820
        %v829 = vadd.f32 %v793, %v821
        %v830 = vadd.f32 %v794, %v822
        %v831 = vadd.f32 %v795, %v823
        %v832 = vadd.f32 %v796, %v824
        %v833 = vadd.f32 %v797, %v825
        %v834 = vadd.f32 %v798, %v826
        %s835 = scalar_lea.vmem [#allocation2], 2
        %v836 = vld [vmem:[%s835] ss:$2 sm:$0xff]
        %s837 = scalar_lea.vmem [#allocation2], 50
        %v838 = vld [vmem:[%s837] ss:$2 sm:$0xff]
        %s839 = scalar_lea.vmem [#allocation2], 98
        %v840 = vld [vmem:[%s839] ss:$2 sm:$0xff]
        %s841 = scalar_lea.vmem [#allocation2], 146
        %v842 = vld [vmem:[%s841] ss:$2 sm:$0xff]
        %s843 = scalar_lea.vmem [#allocation2], 194
        %v844 = vld [vmem:[%s843] ss:$2 sm:$0xff]
        %s845 = scalar_lea.vmem [#allocation2], 242
        %v846 = vld [vmem:[%s845] ss:$2 sm:$0xff]
        %s847 = scalar_lea.vmem [#allocation2], 290
        %v848 = vld [vmem:[%s847] ss:$2 sm:$0xff]
        %s849 = scalar_lea.vmem [#allocation2], 338
        %v850 = vld [vmem:[%s849] ss:$2 sm:$0xff]
        %v851 = vlaneseq
        %v852 = vshrl.u32 %v851, 7
        %v853 = vsub.s32 2, %v852
        %v854 = vrot.slane %v761, %v853
        %v855 = vmul.f32 %v836, %v854
        %v856 = vmul.f32 %v838, %v854
        %v857 = vmul.f32 %v840, %v854
        %v858 = vmul.f32 %v842, %v854
        %v859 = vmul.f32 %v844, %v854
        %v860 = vmul.f32 %v846, %v854
        %v861 = vmul.f32 %v848, %v854
        %v862 = vmul.f32 %v850, %v854
        %v863 = vadd.f32 %v827, %v855
        %v864 = vadd.f32 %v828, %v856
        %v865 = vadd.f32 %v829, %v857
        %v866 = vadd.f32 %v830, %v858
        %v867 = vadd.f32 %v831, %v859
        %v868 = vadd.f32 %v832, %v860
        %v869 = vadd.f32 %v833, %v861
        %v870 = vadd.f32 %v834, %v862
        %v871 = vld [vmem:[%s728] ss:$2 sm:$0xff]
        %s872 = scalar_lea.vmem %s728, 48 [#allocation2]
        %v873 = vld [vmem:[%s872] ss:$2 sm:$0xff]
        %s874 = scalar_lea.vmem %s728, 96 [#allocation2]
        %v875 = vld [vmem:[%s874] ss:$2 sm:$0xff]
        %s876 = scalar_lea.vmem %s728, 144 [#allocation2]
        %v877 = vld [vmem:[%s876] ss:$2 sm:$0xff]
        %s878 = scalar_lea.vmem %s728, 192 [#allocation2]
        %v879 = vld [vmem:[%s878] ss:$2 sm:$0xff]
        %s880 = scalar_lea.vmem %s728, 240 [#allocation2]
        %v881 = vld [vmem:[%s880] ss:$2 sm:$0xff]
        %s882 = scalar_lea.vmem %s728, 288 [#allocation2]
        %v883 = vld [vmem:[%s882] ss:$2 sm:$0xff]
        %s884 = scalar_lea.vmem %s728, 336 [#allocation2]
        %v885 = vld [vmem:[%s884] ss:$2 sm:$0xff]
        %v886 = vlaneseq
        %v887 = vshrl.u32 %v886, 7
        %v888 = vsub.s32 0, %v887
        %v889 = vrot.slane %v762, %v888
        %v890 = vmul.f32 %v871, %v889
        %v891 = vmul.f32 %v873, %v889
        %v892 = vmul.f32 %v875, %v889
        %v893 = vmul.f32 %v877, %v889
        %v894 = vmul.f32 %v879, %v889
        %v895 = vmul.f32 %v881, %v889
        %v896 = vmul.f32 %v883, %v889
        %v897 = vmul.f32 %v885, %v889
        %v898 = vadd.f32 %v863, %v890
        %v899 = vadd.f32 %v864, %v891
        %v900 = vadd.f32 %v865, %v892
        %v901 = vadd.f32 %v866, %v893
        %v902 = vadd.f32 %v867, %v894
        %v903 = vadd.f32 %v868, %v895
        %v904 = vadd.f32 %v869, %v896
        %v905 = vadd.f32 %v870, %v897
        %s906 = scalar_lea.vmem %s728, 1 [#allocation2]
        %v907 = vld [vmem:[%s906] ss:$2 sm:$0xff]
        %s908 = scalar_lea.vmem %s728, 49 [#allocation2]
        %v909 = vld [vmem:[%s908] ss:$2 sm:$0xff]
        %s910 = scalar_lea.vmem %s728, 97 [#allocation2]
        %v911 = vld [vmem:[%s910] ss:$2 sm:$0xff]
        %s912 = scalar_lea.vmem %s728, 145 [#allocation2]
        %v913 = vld [vmem:[%s912] ss:$2 sm:$0xff]
        %s914 = scalar_lea.vmem %s728, 193 [#allocation2]
        %v915 = vld [vmem:[%s914] ss:$2 sm:$0xff]
        %s916 = scalar_lea.vmem %s728, 241 [#allocation2]
        %v917 = vld [vmem:[%s916] ss:$2 sm:$0xff]
        %s918 = scalar_lea.vmem %s728, 289 [#allocation2]
        %v919 = vld [vmem:[%s918] ss:$2 sm:$0xff]
        %s920 = scalar_lea.vmem %s728, 337 [#allocation2]
        %v921 = vld [vmem:[%s920] ss:$2 sm:$0xff]
        %v922 = vlaneseq
        %v923 = vshrl.u32 %v922, 7
        %v924 = vsub.s32 1, %v923
        %v925 = vrot.slane %v762, %v924
        %v926 = vmul.f32 %v907, %v925
        %v927 = vmul.f32 %v909, %v925
        %v928 = vmul.f32 %v911, %v925
        %v929 = vmul.f32 %v913, %v925
        %v930 = vmul.f32 %v915, %v925
        %v931 = vmul.f32 %v917, %v925
        %v932 = vmul.f32 %v919, %v925
        %v933 = vmul.f32 %v921, %v925
        %v934 = vadd.f32 %v898, %v926
        %v935 = vadd.f32 %v899, %v927
        %v936 = vadd.f32 %v900, %v928
        %v937 = vadd.f32 %v901, %v929
        %v938 = vadd.f32 %v902, %v930
        %v939 = vadd.f32 %v903, %v931
        %v940 = vadd.f32 %v904, %v932
        %v941 = vadd.f32 %v905, %v933
        %s942 = scalar_lea.vmem %s728, 2 [#allocation2]
        %v943 = vld [vmem:[%s942] ss:$2 sm:$0xff]
        %s944 = scalar_lea.vmem %s728, 50 [#allocation2]
        %v945 = vld [vmem:[%s944] ss:$2 sm:$0xff]
        %s946 = scalar_lea.vmem %s728, 98 [#allocation2]
        %v947 = vld [vmem:[%s946] ss:$2 sm:$0xff]
        %s948 = scalar_lea.vmem %s728, 146 [#allocation2]
        %v949 = vld [vmem:[%s948] ss:$2 sm:$0xff]
        %s950 = scalar_lea.vmem %s728, 194 [#allocation2]
        %v951 = vld [vmem:[%s950] ss:$2 sm:$0xff]
        %s952 = scalar_lea.vmem %s728, 242 [#allocation2]
        %v953 = vld [vmem:[%s952] ss:$2 sm:$0xff]
        %s954 = scalar_lea.vmem %s728, 290 [#allocation2]
        %v955 = vld [vmem:[%s954] ss:$2 sm:$0xff]
        %s956 = scalar_lea.vmem %s728, 338 [#allocation2]
        %v957 = vld [vmem:[%s956] ss:$2 sm:$0xff]
        %v958 = vlaneseq
        %v959 = vshrl.u32 %v958, 7
        %v960 = vsub.s32 2, %v959
        %v961 = vrot.slane %v762, %v960
        %v962 = vmul.f32 %v943, %v961
        %v963 = vmul.f32 %v945, %v961
        %v964 = vmul.f32 %v947, %v961
        %v965 = vmul.f32 %v949, %v961
        %v966 = vmul.f32 %v951, %v961
        %v967 = vmul.f32 %v953, %v961
        %v968 = vmul.f32 %v955, %v961
        %v969 = vmul.f32 %v957, %v961
        %v970 = vadd.f32 %v934, %v962
        %v971 = vadd.f32 %v935, %v963
        %v972 = vadd.f32 %v936, %v964
        %v973 = vadd.f32 %v937, %v965
        %v974 = vadd.f32 %v938, %v966
        %v975 = vadd.f32 %v939, %v967
        %v976 = vadd.f32 %v940, %v968
        %v977 = vadd.f32 %v941, %v969
        %s978 = scalar_lea.vmem [#allocation2], 48
        %v979 = vld [vmem:[%s978] ss:$2 sm:$0xff]
        %s980 = scalar_lea.vmem %s978, 48 [#allocation2]
        %v981 = vld [vmem:[%s980] ss:$2 sm:$0xff]
        %s982 = scalar_lea.vmem %s978, 96 [#allocation2]
        %v983 = vld [vmem:[%s982] ss:$2 sm:$0xff]
        %s984 = scalar_lea.vmem %s978, 144 [#allocation2]
        %v985 = vld [vmem:[%s984] ss:$2 sm:$0xff]
        %s986 = scalar_lea.vmem %s978, 192 [#allocation2]
        %v987 = vld [vmem:[%s986] ss:$2 sm:$0xff]
        %s988 = scalar_lea.vmem %s978, 240 [#allocation2]
        %v989 = vld [vmem:[%s988] ss:$2 sm:$0xff]
        %s990 = scalar_lea.vmem %s978, 288 [#allocation2]
        %v991 = vld [vmem:[%s990] ss:$2 sm:$0xff]
        %s992 = scalar_lea.vmem %s978, 336 [#allocation2]
        %v993 = vld [vmem:[%s992] ss:$2 sm:$0xff]
        %v994 = vlaneseq
        %v995 = vshrl.u32 %v994, 7
        %v996 = vsub.s32 0, %v995
        %v997 = vrot.slane %v763, %v996
        %v998 = vmul.f32 %v979, %v997
        %v999 = vmul.f32 %v981, %v997
        %v1000 = vmul.f32 %v983, %v997
        %v1001 = vmul.f32 %v985, %v997
        %v1002 = vmul.f32 %v987, %v997
        %v1003 = vmul.f32 %v989, %v997
        %v1004 = vmul.f32 %v991, %v997
        %v1005 = vmul.f32 %v993, %v997
        %v1006 = vadd.f32 %v970, %v998
        %v1007 = vadd.f32 %v971, %v999
        %v1008 = vadd.f32 %v972, %v1000
        %v1009 = vadd.f32 %v973, %v1001
        %v1010 = vadd.f32 %v974, %v1002
        %v1011 = vadd.f32 %v975, %v1003
        %v1012 = vadd.f32 %v976, %v1004
        %v1013 = vadd.f32 %v977, %v1005
        %s1014 = scalar_lea.vmem %s978, 1 [#allocation2]
        %v1015 = vld [vmem:[%s1014] ss:$2 sm:$0xff]
        %s1016 = scalar_lea.vmem %s978, 49 [#allocation2]
        %v1017 = vld [vmem:[%s1016] ss:$2 sm:$0xff]
        %s1018 = scalar_lea.vmem %s978, 97 [#allocation2]
        %v1019 = vld [vmem:[%s1018] ss:$2 sm:$0xff]
        %s1020 = scalar_lea.vmem %s978, 145 [#allocation2]
        %v1021 = vld [vmem:[%s1020] ss:$2 sm:$0xff]
        %s1022 = scalar_lea.vmem %s978, 193 [#allocation2]
        %v1023 = vld [vmem:[%s1022] ss:$2 sm:$0xff]
        %s1024 = scalar_lea.vmem %s978, 241 [#allocation2]
        %v1025 = vld [vmem:[%s1024] ss:$2 sm:$0xff]
        %s1026 = scalar_lea.vmem %s978, 289 [#allocation2]
        %v1027 = vld [vmem:[%s1026] ss:$2 sm:$0xff]
        %s1028 = scalar_lea.vmem %s978, 337 [#allocation2]
        %v1029 = vld [vmem:[%s1028] ss:$2 sm:$0xff]
        %v1030 = vlaneseq
        %v1031 = vshrl.u32 %v1030, 7
        %v1032 = vsub.s32 1, %v1031
        %v1033 = vrot.slane %v763, %v1032
        %v1034 = vmul.f32 %v1015, %v1033
        %v1035 = vmul.f32 %v1017, %v1033
        %v1036 = vmul.f32 %v1019, %v1033
        %v1037 = vmul.f32 %v1021, %v1033
        %v1038 = vmul.f32 %v1023, %v1033
        %v1039 = vmul.f32 %v1025, %v1033
        %v1040 = vmul.f32 %v1027, %v1033
        %v1041 = vmul.f32 %v1029, %v1033
        %v1042 = vadd.f32 %v1006, %v1034
        %v1043 = vadd.f32 %v1007, %v1035
        %v1044 = vadd.f32 %v1008, %v1036
        %v1045 = vadd.f32 %v1009, %v1037
        %v1046 = vadd.f32 %v1010, %v1038
        %v1047 = vadd.f32 %v1011, %v1039
        %v1048 = vadd.f32 %v1012, %v1040
        %v1049 = vadd.f32 %v1013, %v1041
        %s1050 = scalar_lea.vmem %s978, 2 [#allocation2]
        %v1051 = vld [vmem:[%s1050] ss:$2 sm:$0xff]
        %s1052 = scalar_lea.vmem %s978, 50 [#allocation2]
        %v1053 = vld [vmem:[%s1052] ss:$2 sm:$0xff]
        %s1054 = scalar_lea.vmem %s978, 98 [#allocation2]
        %v1055 = vld [vmem:[%s1054] ss:$2 sm:$0xff]
        %s1056 = scalar_lea.vmem %s978, 146 [#allocation2]
        %v1057 = vld [vmem:[%s1056] ss:$2 sm:$0xff]
        %s1058 = scalar_lea.vmem %s978, 194 [#allocation2]
        %v1059 = vld [vmem:[%s1058] ss:$2 sm:$0xff]
        %s1060 = scalar_lea.vmem %s978, 242 [#allocation2]
        %v1061 = vld [vmem:[%s1060] ss:$2 sm:$0xff]
        %s1062 = scalar_lea.vmem %s978, 290 [#allocation2]
        %v1063 = vld [vmem:[%s1062] ss:$2 sm:$0xff]
        %s1064 = scalar_lea.vmem %s978, 338 [#allocation2]
        %v1065 = vld [vmem:[%s1064] ss:$2 sm:$0xff]
        %v1066 = vlaneseq
        %v1067 = vshrl.u32 %v1066, 7
        %v1068 = vsub.s32 2, %v1067
        %v1069 = vrot.slane %v763, %v1068
        %v1070 = vmul.f32 %v1051, %v1069
        %v1071 = vmul.f32 %v1053, %v1069
        %v1072 = vmul.f32 %v1055, %v1069
        %v1073 = vmul.f32 %v1057, %v1069
        %v1074 = vmul.f32 %v1059, %v1069
        %v1075 = vmul.f32 %v1061, %v1069
        %v1076 = vmul.f32 %v1063, %v1069
        %v1077 = vmul.f32 %v1065, %v1069
        %v1078 = vadd.f32 %v1042, %v1070
        %v1079 = vadd.f32 %v1043, %v1071
        %v1080 = vadd.f32 %v1044, %v1072
        %v1081 = vadd.f32 %v1045, %v1073
        %v1082 = vadd.f32 %v1046, %v1074
        %v1083 = vadd.f32 %v1047, %v1075
        %v1084 = vadd.f32 %v1048, %v1076
        %v1085 = vadd.f32 %v1049, %v1077
        %v1086 = vld [vmem:[%s4] sm:$0x1]
        %v1088 = vlaneseq
        %v1089 = vshrl.u32 %v1088, 7
        %v1090 = vsub.s32 0, %v1089
        %v1091 = vrot.slane %v1086, %v1090
        %v1093 = vadd.f32 %v1078, %v1091
        %v1094 = vadd.f32 %v1079, %v1091
        %v1095 = vadd.f32 %v1080, %v1091
        %v1096 = vadd.f32 %v1081, %v1091
        %v1097 = vadd.f32 %v1082, %v1091
        %v1098 = vadd.f32 %v1083, %v1091
        %v1099 = vadd.f32 %v1084, %v1091
        %v1100 = vadd.f32 %v1085, %v1091
        %v1101 = vmax.f32 %v1093, 0.0
        %v1102 = vmax.f32 %v1094, 0.0
        %v1103 = vmax.f32 %v1095, 0.0
        %v1104 = vmax.f32 %v1096, 0.0
        %v1105 = vmax.f32 %v1097, 0.0
        %v1106 = vmax.f32 %v1098, 0.0
        %v1107 = vmax.f32 %v1099, 0.0
        %v1108 = vmax.f32 %v1100, 0.0
        %v1109 = vld [vmem:[%s5] sm:$0xff]
        %v1110 = vld [vmem:[%s6] sm:$0x1]
        %v1112 = vlaneseq
        %v1113 = vshrl.u32 %v1112, 7
        %v1114 = vsub.s32 0, %v1113
        %v1115 = vrot.slane %v1110, %v1114
        %v1118 = vsel %vm672, %v1101, 0
        %v1121 = vsel %vm672, %v1102, 0
        %v1124 = vsel %vm672, %v1103, 0
        %v1127 = vsel %vm672, %v1104, 0
        %v1130 = vsel %vm672, %v1105, 0
        %v1133 = vsel %vm672, %v1106, 0
        %v1136 = vsel %vm672, %v1107, 0
        %v1139 = vsel %vm672, %v1108, 0
        %1141 = vmatprep.subr.mxu0 0.0
        %1142 = vmatpush1.msra.mxu0 %v1109
        %1143 = vmatprep.subr.mxu0 0.0
        %1144 = vmatpush1.msra.mxu0 0.0
        %1145 = vmatprep.subr.mxu0 0.0
        %1146 = vmatpush1.msra.mxu0 0.0
        %1147 = vmatprep.subr.mxu0 0.0
        %1148 = vmatpush1.msra.mxu0 0.0
        %1149 = vmatprep.subr.mxu0 0.0
        %1150 = vmatpush1.msra.mxu0 0.0
        %1151 = vmatprep.subr.mxu0 0.0
        %1152 = vmatpush1.msra.mxu0 0.0
        %1153 = vmatprep.subr.mxu0 0.0
        %1154 = vmatpush1.msra.mxu0 0.0
        %1155 = vmatprep.subr.mxu0 0.0
        %1156 = vmatpush1.msra.mxu0 0.0
        %1157 = vmatprep.subr.mxu0 0.0
        %1158 = vmatpush1.msra.mxu0 0.0
        %1159 = vmatprep.subr.mxu0 0.0
        %1160 = vmatpush1.msra.mxu0 0.0
        %1161 = vmatprep.subr.mxu0 0.0
        %1162 = vmatpush1.msra.mxu0 0.0
        %1163 = vmatprep.subr.mxu0 0.0
        %1164 = vmatpush1.msra.mxu0 0.0
        %1165 = vmatprep.subr.mxu0 0.0
        %1166 = vmatpush1.msra.mxu0 0.0
        %1167 = vmatprep.subr.mxu0 0.0
        %1168 = vmatpush1.msra.mxu0 0.0
        %1169 = vmatprep.subr.mxu0 0.0
        %1170 = vmatpush1.msra.mxu0 0.0
        %1171 = vmatprep.subr.mxu0 0.0
        %1172 = vmatpush1.msra.mxu0 0.0
        %1173 = vmatprep.subr.mxu0 0.0
        %1174 = vmatpush1.msra.mxu0 0.0
        %1175 = vmatprep.subr.mxu0 0.0
        %1176 = vmatpush1.msra.mxu0 0.0
        %1177 = vmatprep.subr.mxu0 0.0
        %1178 = vmatpush1.msra.mxu0 0.0
        %1179 = vmatprep.subr.mxu0 0.0
        %1180 = vmatpush1.msra.mxu0 0.0
        %1181 = vmatprep.subr.mxu0 0.0
        %1182 = vmatpush1.msra.mxu0 0.0
        %1183 = vmatprep.subr.mxu0 0.0
        %1184 = vmatpush1.msra.mxu0 0.0
        %1185 = vmatprep.subr.mxu0 0.0
        %1186 = vmatpush1.msra.mxu0 0.0
        %1187 = vmatprep.subr.mxu0 0.0
        %1188 = vmatpush1.msra.mxu0 0.0
        %1189 = vmatprep.subr.mxu0 0.0
        %1190 = vmatpush1.msra.mxu0 0.0
        %1191 = vmatprep.subr.mxu0 0.0
        %1192 = vmatpush1.msra.mxu0 0.0
        %1193 = vmatprep.subr.mxu0 0.0
        %1194 = vmatpush1.msra.mxu0 0.0
        %1195 = vmatprep.subr.mxu0 0.0
        %1196 = vmatpush1.msra.mxu0 0.0
        %1197 = vmatprep.subr.mxu0 0.0
        %1198 = vmatpush1.msra.mxu0 0.0
        %1199 = vmatprep.subr.mxu0 0.0
        %1200 = vmatpush1.msra.mxu0 0.0
        %1201 = vmatprep.subr.mxu0 0.0
        %1202 = vmatpush1.msra.mxu0 0.0
        %1203 = vmatprep.subr.mxu0 0.0
        %1204 = vmatpush1.msra.mxu0 0.0
        %1205 = vmatprep.mubr.f32.mxu0 0.0
        %1206 = vmatmul.mubr.f32.gmra.mrb[0].mxu0 %v1118
        %v1207 = vpop.f32.mrb[0].mxu0
        %v1208 = vadd.f32 %v1115, %v1207
        %v1209 = vpop.f32.mrb[0].mxu0
        %1210 = vmatprep.mubr.f32.mxu0 0.0
        %1211 = vmatmul.mubr.f32.gmra.mrb[0].mxu0 %v1121
        %v1212 = vpop.f32.mrb[0].mxu0
        %v1213 = vadd.f32 %v1115, %v1212
        %v1214 = vpop.f32.mrb[0].mxu0
        %1215 = vmatprep.mubr.f32.mxu0 0.0
        %1216 = vmatmul.mubr.f32.gmra.mrb[0].mxu0 %v1124
        %v1217 = vpop.f32.mrb[0].mxu0
        %v1218 = vadd.f32 %v1115, %v1217
        %v1219 = vpop.f32.mrb[0].mxu0
        %1220 = vmatprep.mubr.f32.mxu0 0.0
        %1221 = vmatmul.mubr.f32.gmra.mrb[0].mxu0 %v1127
        %v1222 = vpop.f32.mrb[0].mxu0
        %v1223 = vadd.f32 %v1115, %v1222
        %v1224 = vpop.f32.mrb[0].mxu0
        %1225 = vmatprep.mubr.f32.mxu0 0.0
        %1226 = vmatmul.mubr.f32.gmra.mrb[0].mxu0 %v1130
        %v1227 = vpop.f32.mrb[0].mxu0
        %v1228 = vadd.f32 %v1115, %v1227
        %v1229 = vpop.f32.mrb[0].mxu0
        %1230 = vmatprep.mubr.f32.mxu0 0.0
        %1231 = vmatmul.mubr.f32.gmra.mrb[0].mxu0 %v1133
        %v1232 = vpop.f32.mrb[0].mxu0
        %v1233 = vadd.f32 %v1115, %v1232
        %v1234 = vpop.f32.mrb[0].mxu0
        %1235 = vmatprep.mubr.f32.mxu0 0.0
        %1236 = vmatmul.mubr.f32.gmra.mrb[0].mxu0 %v1136
        %v1237 = vpop.f32.mrb[0].mxu0
        %v1238 = vadd.f32 %v1115, %v1237
        %v1239 = vpop.f32.mrb[0].mxu0
        %1240 = vmatprep.mubr.f32.mxu0 0.0
        %1241 = vmatmul.mubr.f32.gmra.mrb[0].mxu0 %v1139
        %v1242 = vpop.f32.mrb[0].mxu0
        %v1243 = vadd.f32 %v1115, %v1242
        %v1244 = vpop.f32.mrb[0].mxu0
        %1245 = vdwg.mxu0
        %1246 = vst.msk [vmem:[#allocation3] sm:$0xff] %vm318, 0.0
        %1247 = vst.msk [vmem:[#allocation3 + $0x8] sm:$0xff] %vm318, 0.0
        %vm1248 = vcmask 123904
        %1249 = vst.msk [vmem:[#allocation3 + $0x10] sm:$0x3] %vm1248, 0.0
        %1250 = vst.msk [vmem:[#allocation3 + $0x18] sm:$0xff] %vm318, 0.0
        %1251 = vst.msk [vmem:[#allocation3 + $0x20] sm:$0xff] %vm318, 0.0
        %1252 = vst.msk [vmem:[#allocation3 + $0x28] sm:$0x3] %vm1248, 0.0
        %1253 = vst.msk [vmem:[#allocation3 + $0x30] sm:$0xff] %vm318, 0.0
        %1254 = vst.msk [vmem:[#allocation3 + $0x38] sm:$0xff] %vm318, 0.0
        %1255 = vst.msk [vmem:[#allocation3 + $0x40] sm:$0x3] %vm1248, 0.0
        %1256 = vst.msk [vmem:[#allocation3 + $0x48] sm:$0xff] %vm318, 0.0
        %1257 = vst.msk [vmem:[#allocation3 + $0x50] sm:$0xff] %vm318, 0.0
        %1258 = vst.msk [vmem:[#allocation3 + $0x58] sm:$0x3] %vm1248, 0.0
        %1259 = vst.msk [vmem:[#allocation3 + $0x60] sm:$0xff] %vm318, 0.0
        %1260 = vst.msk [vmem:[#allocation3 + $0x68] sm:$0xff] %vm318, 0.0
        %1261 = vst.msk [vmem:[#allocation3 + $0x70] sm:$0x3] %vm1248, 0.0
        %1262 = vst.msk [vmem:[#allocation3 + $0x78] sm:$0xff] %vm318, 0.0
        %1263 = vst.msk [vmem:[#allocation3 + $0x80] sm:$0xff] %vm318, 0.0
        %1264 = vst.msk [vmem:[#allocation3 + $0x88] sm:$0x3] %vm1248, 0.0
        %1265 = vst.msk [vmem:[#allocation3 + $0x90] sm:$0xff] %vm318, 0.0
        %1266 = vst.msk [vmem:[#allocation3 + $0x98] sm:$0xff] %vm318, 0.0
        %1267 = vst.msk [vmem:[#allocation3 + $0xa0] sm:$0x3] %vm1248, 0.0
        %1268 = vst.msk [vmem:[#allocation3 + $0xa8] sm:$0xff] %vm318, 0.0
        %1269 = vst.msk [vmem:[#allocation3 + $0xb0] sm:$0xff] %vm318, 0.0
        %1270 = vst.msk [vmem:[#allocation3 + $0xb8] sm:$0x3] %vm1248, 0.0
        %1271 = vst.msk [vmem:[#allocation3 + $0xc0] sm:$0xff] %vm318, 0.0
        %1272 = vst.msk [vmem:[#allocation3 + $0xc8] sm:$0xff] %vm318, 0.0
        %1273 = vst.msk [vmem:[#allocation3 + $0xd0] sm:$0x3] %vm1248, 0.0
        %1274 = vst.msk [vmem:[#allocation3 + $0xd8] sm:$0xff] %vm318, 0.0
        %1275 = vst.msk [vmem:[#allocation3 + $0xe0] sm:$0xff] %vm318, 0.0
        %1276 = vst.msk [vmem:[#allocation3 + $0xe8] sm:$0x3] %vm1248, 0.0
        %1277 = vst.msk [vmem:[#allocation3 + $0xf0] sm:$0xff] %vm318, 0.0
        %1278 = vst.msk [vmem:[#allocation3 + $0xf8] sm:$0xff] %vm318, 0.0
        %1279 = vst.msk [vmem:[#allocation3 + $0x100] sm:$0x3] %vm1248, 0.0
        %1280 = vst.msk [vmem:[#allocation3 + $0x108] sm:$0xff] %vm318, 0.0
        %1281 = vst.msk [vmem:[#allocation3 + $0x110] sm:$0xff] %vm318, 0.0
        %1282 = vst.msk [vmem:[#allocation3 + $0x118] sm:$0x3] %vm1248, 0.0
        %1283 = vst.msk [vmem:[#allocation3 + $0x120] sm:$0xff] %vm318, 0.0
        %1284 = vst.msk [vmem:[#allocation3 + $0x128] sm:$0xff] %vm318, 0.0
        %1285 = vst.msk [vmem:[#allocation3 + $0x130] sm:$0x3] %vm1248, 0.0
        %1286 = vst.msk [vmem:[#allocation3 + $0x138] sm:$0xff] %vm318, 0.0
        %1287 = vst.msk [vmem:[#allocation3 + $0x140] sm:$0xff] %vm318, 0.0
        %1288 = vst.msk [vmem:[#allocation3 + $0x148] sm:$0x3] %vm1248, 0.0
        %1289 = vst.msk [vmem:[#allocation3 + $0x150] sm:$0xff] %vm318, 0.0
        %1290 = vst.msk [vmem:[#allocation3 + $0x158] sm:$0xff] %vm318, 0.0
        %1291 = vst.msk [vmem:[#allocation3 + $0x160] sm:$0x3] %vm1248, 0.0
        %1292 = vst.msk [vmem:[#allocation3 + $0x168] sm:$0xff] %vm318, 0.0
        %1293 = vst.msk [vmem:[#allocation3 + $0x170] sm:$0xff] %vm318, 0.0
        %1294 = vst.msk [vmem:[#allocation3 + $0x178] sm:$0x3] %vm1248, 0.0
        %1295 = vst.msk [vmem:[#allocation3 + $0x180] sm:$0xff] %vm318, 0.0
        %1296 = vst.msk [vmem:[#allocation3 + $0x188] sm:$0xff] %vm318, 0.0
        %1297 = vst.msk [vmem:[#allocation3 + $0x190] sm:$0x3] %vm1248, 0.0
        %1298 = vst.msk [vmem:[#allocation3 + $0x198] sm:$0xff] %vm318, 0.0
        %1299 = vst.msk [vmem:[#allocation3 + $0x1a0] sm:$0xff] %vm318, 0.0
        %1300 = vst.msk [vmem:[#allocation3 + $0x1a8] sm:$0x3] %vm1248, 0.0
        %v1301 = vld [vmem:[%s276] sm:$0xff]
        %v1302 = vld [vmem:[%s276 + $0x8] sm:$0xff]
        %v1303 = vld [vmem:[%s276 + $0x10] sm:$0xff]
        %v1304 = vld [vmem:[%s276 + $0x18] sm:$0xff]
        %v1305 = vld [vmem:[%s276 + $0x20] sm:$0xff]
        %v1306 = vld [vmem:[%s276 + $0x28] sm:$0xff]
        %v1307 = vld [vmem:[%s276 + $0x30] sm:$0xff]
        %v1308 = vld [vmem:[%s276 + $0x38] sm:$0xff]
        %v1309 = vld [vmem:[%s276 + $0x40] sm:$0xff]
        %v1310 = vld [vmem:[%s276 + $0x48] sm:$0xff]
        %v1311 = vld [vmem:[%s276 + $0x50] sm:$0xff]
        %v1312 = vld [vmem:[%s276 + $0x58] sm:$0xff]
        %v1313 = vld [vmem:[%s276 + $0x60] sm:$0xff]
        %v1314 = vld [vmem:[%s276 + $0x68] sm:$0xff]
        %v1315 = vld [vmem:[%s276 + $0x70] sm:$0xff]
        %v1316 = vld [vmem:[%s276 + $0x78] sm:$0xff]
        %v1317 = vld [vmem:[%s276 + $0x80] sm:$0xff]
        %v1318 = vld [vmem:[%s276 + $0x88] sm:$0xff]
        %v1319 = vld [vmem:[%s276 + $0x90] sm:$0xff]
        %v1320 = vld [vmem:[%s276 + $0x98] sm:$0xff]
        %v1321 = vld [vmem:[%s276 + $0xa0] sm:$0xff]
        %v1322 = vld [vmem:[%s276 + $0xa8] sm:$0xff]
        %v1323 = vld [vmem:[%s276 + $0xb0] sm:$0xff]
        %v1324 = vld [vmem:[%s276 + $0xb8] sm:$0xff]
        %v1325 = vld [vmem:[%s276 + $0xc0] sm:$0xff]
        %v1326 = vld [vmem:[%s276 + $0xc8] sm:$0xff]
        %v1327 = vld [vmem:[%s276 + $0xd0] sm:$0xff]
        %v1328 = vld [vmem:[%s276 + $0xd8] sm:$0xff]
        %v1329 = vld [vmem:[%s276 + $0xe0] sm:$0xff]
        %v1330 = vld [vmem:[%s276 + $0xe8] sm:$0xff]
        %v1331 = vld [vmem:[%s276 + $0xf0] sm:$0xff]
        %v1332 = vld [vmem:[%s276 + $0xf8] sm:$0xff]
        %s1333 = scalar_lea.vmem [#allocation3], 24
        %1334 = vst.msk [vmem:[%s1333 + $0x1] sm:$0xff] %vm318, %v1301
        %1335 = vst.msk [vmem:[%s1333 + $0x9] sm:$0xff] %vm318, %v1302
        %1336 = vst.msk [vmem:[%s1333 + $0x19] sm:$0xff] %vm318, %v1303
        %1337 = vst.msk [vmem:[%s1333 + $0x21] sm:$0xff] %vm318, %v1304
        %1338 = vst.msk [vmem:[%s1333 + $0x31] sm:$0xff] %vm318, %v1305
        %1339 = vst.msk [vmem:[%s1333 + $0x39] sm:$0xff] %vm318, %v1306
        %1340 = vst.msk [vmem:[%s1333 + $0x49] sm:$0xff] %vm318, %v1307
        %1341 = vst.msk [vmem:[%s1333 + $0x51] sm:$0xff] %vm318, %v1308
        %1342 = vst.msk [vmem:[%s1333 + $0x61] sm:$0xff] %vm318, %v1309
        %1343 = vst.msk [vmem:[%s1333 + $0x69] sm:$0xff] %vm318, %v1310
        %1344 = vst.msk [vmem:[%s1333 + $0x79] sm:$0xff] %vm318, %v1311
        %1345 = vst.msk [vmem:[%s1333 + $0x81] sm:$0xff] %vm318, %v1312
        %1346 = vst.msk [vmem:[%s1333 + $0x91] sm:$0xff] %vm318, %v1313
        %1347 = vst.msk [vmem:[%s1333 + $0x99] sm:$0xff] %vm318, %v1314
        %1348 = vst.msk [vmem:[%s1333 + $0xa9] sm:$0xff] %vm318, %v1315
        %1349 = vst.msk [vmem:[%s1333 + $0xb1] sm:$0xff] %vm318, %v1316
        %1350 = vst.msk [vmem:[%s1333 + $0xc1] sm:$0xff] %vm318, %v1317
        %1351 = vst.msk [vmem:[%s1333 + $0xc9] sm:$0xff] %vm318, %v1318
        %1352 = vst.msk [vmem:[%s1333 + $0xd9] sm:$0xff] %vm318, %v1319
        %1353 = vst.msk [vmem:[%s1333 + $0xe1] sm:$0xff] %vm318, %v1320
        %1354 = vst.msk [vmem:[%s1333 + $0xf1] sm:$0xff] %vm318, %v1321
        %1355 = vst.msk [vmem:[%s1333 + $0xf9] sm:$0xff] %vm318, %v1322
        %1356 = vst.msk [vmem:[%s1333 + $0x109] sm:$0xff] %vm318, %v1323
        %1357 = vst.msk [vmem:[%s1333 + $0x111] sm:$0xff] %vm318, %v1324
        %1358 = vst.msk [vmem:[%s1333 + $0x121] sm:$0xff] %vm318, %v1325
        %1359 = vst.msk [vmem:[%s1333 + $0x129] sm:$0xff] %vm318, %v1326
        %1360 = vst.msk [vmem:[%s1333 + $0x139] sm:$0xff] %vm318, %v1327
        %1361 = vst.msk [vmem:[%s1333 + $0x141] sm:$0xff] %vm318, %v1328
        %1362 = vst.msk [vmem:[%s1333 + $0x151] sm:$0xff] %vm318, %v1329
        %1363 = vst.msk [vmem:[%s1333 + $0x159] sm:$0xff] %vm318, %v1330
        %1364 = vst.msk [vmem:[%s1333 + $0x169] sm:$0xff] %vm318, %v1331
        %1365 = vst.msk [vmem:[%s1333 + $0x171] sm:$0xff] %vm318, %v1332
        %v1366 = vld [vmem:[#allocation3] ss:$2 sm:$0xff]
        %s1367 = scalar_lea.vmem [#allocation3], 48
        %v1368 = vld [vmem:[%s1367] ss:$2 sm:$0xff]
        %s1369 = scalar_lea.vmem [#allocation3], 96
        %v1370 = vld [vmem:[%s1369] ss:$2 sm:$0xff]
        %s1371 = scalar_lea.vmem [#allocation3], 144
        %v1372 = vld [vmem:[%s1371] ss:$2 sm:$0xff]
        %s1373 = scalar_lea.vmem [#allocation3], 192
        %v1374 = vld [vmem:[%s1373] ss:$2 sm:$0xff]
        %s1375 = scalar_lea.vmem [#allocation3], 240
        %v1376 = vld [vmem:[%s1375] ss:$2 sm:$0xff]
        %s1377 = scalar_lea.vmem [#allocation3], 288
        %v1378 = vld [vmem:[%s1377] ss:$2 sm:$0xff]
        %s1379 = scalar_lea.vmem [#allocation3], 336
        %v1380 = vld [vmem:[%s1379] ss:$2 sm:$0xff]
        %v1381 = vadd.f32 %v1366, 0.0
        %v1382 = vadd.f32 %v1368, 0.0
        %v1383 = vadd.f32 %v1370, 0.0
        %v1384 = vadd.f32 %v1372, 0.0
        %v1385 = vadd.f32 %v1374, 0.0
        %v1386 = vadd.f32 %v1376, 0.0
        %v1387 = vadd.f32 %v1378, 0.0
        %v1388 = vadd.f32 %v1380, 0.0
        %s1389 = scalar_lea.vmem [#allocation3], 1
        %v1390 = vld [vmem:[%s1389] ss:$2 sm:$0xff]
        %s1391 = scalar_lea.vmem [#allocation3], 49
        %v1392 = vld [vmem:[%s1391] ss:$2 sm:$0xff]
        %s1393 = scalar_lea.vmem [#allocation3], 97
        %v1394 = vld [vmem:[%s1393] ss:$2 sm:$0xff]
        %s1395 = scalar_lea.vmem [#allocation3], 145
        %v1396 = vld [vmem:[%s1395] ss:$2 sm:$0xff]
        %s1397 = scalar_lea.vmem [#allocation3], 193
        %v1398 = vld [vmem:[%s1397] ss:$2 sm:$0xff]
        %s1399 = scalar_lea.vmem [#allocation3], 241
        %v1400 = vld [vmem:[%s1399] ss:$2 sm:$0xff]
        %s1401 = scalar_lea.vmem [#allocation3], 289
        %v1402 = vld [vmem:[%s1401] ss:$2 sm:$0xff]
        %s1403 = scalar_lea.vmem [#allocation3], 337
        %v1404 = vld [vmem:[%s1403] ss:$2 sm:$0xff]
        %v1405 = vadd.f32 %v1381, %v1390
        %v1406 = vadd.f32 %v1382, %v1392
        %v1407 = vadd.f32 %v1383, %v1394
        %v1408 = vadd.f32 %v1384, %v1396
        %v1409 = vadd.f32 %v1385, %v1398
        %v1410 = vadd.f32 %v1386, %v1400
        %v1411 = vadd.f32 %v1387, %v1402
        %v1412 = vadd.f32 %v1388, %v1404
        %s1413 = scalar_lea.vmem [#allocation3], 2
        %v1414 = vld [vmem:[%s1413] ss:$2 sm:$0xff]
        %s1415 = scalar_lea.vmem [#allocation3], 50
        %v1416 = vld [vmem:[%s1415] ss:$2 sm:$0xff]
        %s1417 = scalar_lea.vmem [#allocation3], 98
        %v1418 = vld [vmem:[%s1417] ss:$2 sm:$0xff]
        %s1419 = scalar_lea.vmem [#allocation3], 146
        %v1420 = vld [vmem:[%s1419] ss:$2 sm:$0xff]
        %s1421 = scalar_lea.vmem [#allocation3], 194
        %v1422 = vld [vmem:[%s1421] ss:$2 sm:$0xff]
        %s1423 = scalar_lea.vmem [#allocation3], 242
        %v1424 = vld [vmem:[%s1423] ss:$2 sm:$0xff]
        %s1425 = scalar_lea.vmem [#allocation3], 290
        %v1426 = vld [vmem:[%s1425] ss:$2 sm:$0xff]
        %s1427 = scalar_lea.vmem [#allocation3], 338
        %v1428 = vld [vmem:[%s1427] ss:$2 sm:$0xff]
        %v1429 = vadd.f32 %v1405, %v1414
        %v1430 = vadd.f32 %v1406, %v1416
        %v1431 = vadd.f32 %v1407, %v1418
        %v1432 = vadd.f32 %v1408, %v1420
        %v1433 = vadd.f32 %v1409, %v1422
        %v1434 = vadd.f32 %v1410, %v1424
        %v1435 = vadd.f32 %v1411, %v1426
        %v1436 = vadd.f32 %v1412, %v1428
        %v1437 = vld [vmem:[%s1333] ss:$2 sm:$0xff]
        %s1438 = scalar_lea.vmem %s1333, 48 [#allocation3]
        %v1439 = vld [vmem:[%s1438] ss:$2 sm:$0xff]
        %s1440 = scalar_lea.vmem %s1333, 96 [#allocation3]
        %v1441 = vld [vmem:[%s1440] ss:$2 sm:$0xff]
        %s1442 = scalar_lea.vmem %s1333, 144 [#allocation3]
        %v1443 = vld [vmem:[%s1442] ss:$2 sm:$0xff]
        %s1444 = scalar_lea.vmem %s1333, 192 [#allocation3]
        %v1445 = vld [vmem:[%s1444] ss:$2 sm:$0xff]
        %s1446 = scalar_lea.vmem %s1333, 240 [#allocation3]
        %v1447 = vld [vmem:[%s1446] ss:$2 sm:$0xff]
        %s1448 = scalar_lea.vmem %s1333, 288 [#allocation3]
        %v1449 = vld [vmem:[%s1448] ss:$2 sm:$0xff]
        %s1450 = scalar_lea.vmem %s1333, 336 [#allocation3]
        %v1451 = vld [vmem:[%s1450] ss:$2 sm:$0xff]
        %v1452 = vadd.f32 %v1429, %v1437
        %v1453 = vadd.f32 %v1430, %v1439
        %v1454 = vadd.f32 %v1431, %v1441
        %v1455 = vadd.f32 %v1432, %v1443
        %v1456 = vadd.f32 %v1433, %v1445
        %v1457 = vadd.f32 %v1434, %v1447
        %v1458 = vadd.f32 %v1435, %v1449
        %v1459 = vadd.f32 %v1436, %v1451
        %s1460 = scalar_lea.vmem %s1333, 1 [#allocation3]
        %v1461 = vld [vmem:[%s1460] ss:$2 sm:$0xff]
        %s1462 = scalar_lea.vmem %s1333, 49 [#allocation3]
        %v1463 = vld [vmem:[%s1462] ss:$2 sm:$0xff]
        %s1464 = scalar_lea.vmem %s1333, 97 [#allocation3]
        %v1465 = vld [vmem:[%s1464] ss:$2 sm:$0xff]
        %s1466 = scalar_lea.vmem %s1333, 145 [#allocation3]
        %v1467 = vld [vmem:[%s1466] ss:$2 sm:$0xff]
        %s1468 = scalar_lea.vmem %s1333, 193 [#allocation3]
        %v1469 = vld [vmem:[%s1468] ss:$2 sm:$0xff]
        %s1470 = scalar_lea.vmem %s1333, 241 [#allocation3]
        %v1471 = vld [vmem:[%s1470] ss:$2 sm:$0xff]
        %s1472 = scalar_lea.vmem %s1333, 289 [#allocation3]
        %v1473 = vld [vmem:[%s1472] ss:$2 sm:$0xff]
        %s1474 = scalar_lea.vmem %s1333, 337 [#allocation3]
        %v1475 = vld [vmem:[%s1474] ss:$2 sm:$0xff]
        %v1476 = vadd.f32 %v1452, %v1461
        %v1477 = vadd.f32 %v1453, %v1463
        %v1478 = vadd.f32 %v1454, %v1465
        %v1479 = vadd.f32 %v1455, %v1467
        %v1480 = vadd.f32 %v1456, %v1469
        %v1481 = vadd.f32 %v1457, %v1471
        %v1482 = vadd.f32 %v1458, %v1473
        %v1483 = vadd.f32 %v1459, %v1475
        %s1484 = scalar_lea.vmem %s1333, 2 [#allocation3]
        %v1485 = vld [vmem:[%s1484] ss:$2 sm:$0xff]
        %s1486 = scalar_lea.vmem %s1333, 50 [#allocation3]
        %v1487 = vld [vmem:[%s1486] ss:$2 sm:$0xff]
        %s1488 = scalar_lea.vmem %s1333, 98 [#allocation3]
        %v1489 = vld [vmem:[%s1488] ss:$2 sm:$0xff]
        %s1490 = scalar_lea.vmem %s1333, 146 [#allocation3]
        %v1491 = vld [vmem:[%s1490] ss:$2 sm:$0xff]
        %s1492 = scalar_lea.vmem %s1333, 194 [#allocation3]
        %v1493 = vld [vmem:[%s1492] ss:$2 sm:$0xff]
        %s1494 = scalar_lea.vmem %s1333, 242 [#allocation3]
        %v1495 = vld [vmem:[%s1494] ss:$2 sm:$0xff]
        %s1496 = scalar_lea.vmem %s1333, 290 [#allocation3]
        %v1497 = vld [vmem:[%s1496] ss:$2 sm:$0xff]
        %s1498 = scalar_lea.vmem %s1333, 338 [#allocation3]
        %v1499 = vld [vmem:[%s1498] ss:$2 sm:$0xff]
        %v1500 = vadd.f32 %v1476, %v1485
        %v1501 = vadd.f32 %v1477, %v1487
        %v1502 = vadd.f32 %v1478, %v1489
        %v1503 = vadd.f32 %v1479, %v1491
        %v1504 = vadd.f32 %v1480, %v1493
        %v1505 = vadd.f32 %v1481, %v1495
        %v1506 = vadd.f32 %v1482, %v1497
        %v1507 = vadd.f32 %v1483, %v1499
        %s1508 = scalar_lea.vmem [#allocation3], 48
        %v1509 = vld [vmem:[%s1508] ss:$2 sm:$0xff]
        %s1510 = scalar_lea.vmem %s1508, 48 [#allocation3]
        %v1511 = vld [vmem:[%s1510] ss:$2 sm:$0xff]
        %s1512 = scalar_lea.vmem %s1508, 96 [#allocation3]
        %v1513 = vld [vmem:[%s1512] ss:$2 sm:$0xff]
        %s1514 = scalar_lea.vmem %s1508, 144 [#allocation3]
        %v1515 = vld [vmem:[%s1514] ss:$2 sm:$0xff]
        %s1516 = scalar_lea.vmem %s1508, 192 [#allocation3]
        %v1517 = vld [vmem:[%s1516] ss:$2 sm:$0xff]
        %s1518 = scalar_lea.vmem %s1508, 240 [#allocation3]
        %v1519 = vld [vmem:[%s1518] ss:$2 sm:$0xff]
        %s1520 = scalar_lea.vmem %s1508, 288 [#allocation3]
        %v1521 = vld [vmem:[%s1520] ss:$2 sm:$0xff]
        %s1522 = scalar_lea.vmem %s1508, 336 [#allocation3]
        %v1523 = vld [vmem:[%s1522] ss:$2 sm:$0xff]
        %v1524 = vadd.f32 %v1500, %v1509
        %v1525 = vadd.f32 %v1501, %v1511
        %v1526 = vadd.f32 %v1502, %v1513
        %v1527 = vadd.f32 %v1503, %v1515
        %v1528 = vadd.f32 %v1504, %v1517
        %v1529 = vadd.f32 %v1505, %v1519
        %v1530 = vadd.f32 %v1506, %v1521
        %v1531 = vadd.f32 %v1507, %v1523
        %s1532 = scalar_lea.vmem %s1508, 1 [#allocation3]
        %v1533 = vld [vmem:[%s1532] ss:$2 sm:$0xff]
        %s1534 = scalar_lea.vmem %s1508, 49 [#allocation3]
        %v1535 = vld [vmem:[%s1534] ss:$2 sm:$0xff]
        %s1536 = scalar_lea.vmem %s1508, 97 [#allocation3]
        %v1537 = vld [vmem:[%s1536] ss:$2 sm:$0xff]
        %s1538 = scalar_lea.vmem %s1508, 145 [#allocation3]
        %v1539 = vld [vmem:[%s1538] ss:$2 sm:$0xff]
        %s1540 = scalar_lea.vmem %s1508, 193 [#allocation3]
        %v1541 = vld [vmem:[%s1540] ss:$2 sm:$0xff]
        %s1542 = scalar_lea.vmem %s1508, 241 [#allocation3]
        %v1543 = vld [vmem:[%s1542] ss:$2 sm:$0xff]
        %s1544 = scalar_lea.vmem %s1508, 289 [#allocation3]
        %v1545 = vld [vmem:[%s1544] ss:$2 sm:$0xff]
        %s1546 = scalar_lea.vmem %s1508, 337 [#allocation3]
        %v1547 = vld [vmem:[%s1546] ss:$2 sm:$0xff]
        %v1548 = vadd.f32 %v1524, %v1533
        %v1549 = vadd.f32 %v1525, %v1535
        %v1550 = vadd.f32 %v1526, %v1537
        %v1551 = vadd.f32 %v1527, %v1539
        %v1552 = vadd.f32 %v1528, %v1541
        %v1553 = vadd.f32 %v1529, %v1543
        %v1554 = vadd.f32 %v1530, %v1545
        %v1555 = vadd.f32 %v1531, %v1547
        %s1556 = scalar_lea.vmem %s1508, 2 [#allocation3]
        %v1557 = vld [vmem:[%s1556] ss:$2 sm:$0xff]
        %s1558 = scalar_lea.vmem %s1508, 50 [#allocation3]
        %v1559 = vld [vmem:[%s1558] ss:$2 sm:$0xff]
        %s1560 = scalar_lea.vmem %s1508, 98 [#allocation3]
        %v1561 = vld [vmem:[%s1560] ss:$2 sm:$0xff]
        %s1562 = scalar_lea.vmem %s1508, 146 [#allocation3]
        %v1563 = vld [vmem:[%s1562] ss:$2 sm:$0xff]
        %s1564 = scalar_lea.vmem %s1508, 194 [#allocation3]
        %v1565 = vld [vmem:[%s1564] ss:$2 sm:$0xff]
        %s1566 = scalar_lea.vmem %s1508, 242 [#allocation3]
        %v1567 = vld [vmem:[%s1566] ss:$2 sm:$0xff]
        %s1568 = scalar_lea.vmem %s1508, 290 [#allocation3]
        %v1569 = vld [vmem:[%s1568] ss:$2 sm:$0xff]
        %s1570 = scalar_lea.vmem %s1508, 338 [#allocation3]
        %v1571 = vld [vmem:[%s1570] ss:$2 sm:$0xff]
        %v1572 = vadd.f32 %v1548, %v1557
        %v1573 = vadd.f32 %v1549, %v1559
        %v1574 = vadd.f32 %v1550, %v1561
        %v1575 = vadd.f32 %v1551, %v1563
        %v1576 = vadd.f32 %v1552, %v1565
        %v1577 = vadd.f32 %v1553, %v1567
        %v1578 = vadd.f32 %v1554, %v1569
        %v1579 = vadd.f32 %v1555, %v1571
        %v1580 = vmul.f32 %v1572, 0.11111111
        %v1581 = vmul.f32 %v1573, 0.11111111
        %v1582 = vmul.f32 %v1574, 0.11111111
        %v1583 = vmul.f32 %v1575, 0.11111111
        %v1584 = vmul.f32 %v1576, 0.11111111
        %v1585 = vmul.f32 %v1577, 0.11111111
        %v1586 = vmul.f32 %v1578, 0.11111111
        %v1587 = vmul.f32 %v1579, 0.11111111
        %v1588 = vmax.f32 %v1208, 0.0
        %v1589 = vmax.f32 %v1213, 0.0
        %v1590 = vmax.f32 %v1218, 0.0
        %v1591 = vmax.f32 %v1223, 0.0
        %v1592 = vmax.f32 %v1228, 0.0
        %v1593 = vmax.f32 %v1233, 0.0
        %v1594 = vmax.f32 %v1238, 0.0
        %v1595 = vmax.f32 %v1243, 0.0
        %vm1596 = vcmask 261120
        %1597 = vst.msk [vmem:[%s271] sm:$0xff] %vm1596, %v1588
        %1598 = vst.msk [vmem:[%s271 + $0x8] sm:$0xff] %vm1596, %v1589
        %1599 = vst.msk [vmem:[%s271 + $0x10] sm:$0xff] %vm1596, %v1590
        %1600 = vst.msk [vmem:[%s271 + $0x18] sm:$0xff] %vm1596, %v1591
        %1601 = vst.msk [vmem:[%s271 + $0x20] sm:$0xff] %vm1596, %v1592
        %1602 = vst.msk [vmem:[%s271 + $0x28] sm:$0xff] %vm1596, %v1593
        %1603 = vst.msk [vmem:[%s271 + $0x30] sm:$0xff] %vm1596, %v1594
        %1604 = vst.msk [vmem:[%s271 + $0x38] sm:$0xff] %vm1596, %v1595
        %v1605 = vmax.f32 %v1580, 0.0
        %v1606 = vmax.f32 %v1581, 0.0
        %v1607 = vmax.f32 %v1582, 0.0
        %v1608 = vmax.f32 %v1583, 0.0
        %v1609 = vmax.f32 %v1584, 0.0
        %v1610 = vmax.f32 %v1585, 0.0
        %v1611 = vmax.f32 %v1586, 0.0
        %v1612 = vmax.f32 %v1587, 0.0
        %1621 = vrot.lane.b32.xlu0 %v1605, 32
        %v1622 = vpop.permute.xlu0 %1621
        %1623 = vrot.lane.b32.xlu0 %v1606, 32
        %v1624 = vpop.permute.xlu0 %1623
        %1625 = vrot.lane.b32.xlu0 %v1607, 32
        %v1626 = vpop.permute.xlu0 %1625
        %1627 = vrot.lane.b32.xlu0 %v1608, 32
        %v1628 = vpop.permute.xlu0 %1627
        %1629 = vrot.lane.b32.xlu0 %v1609, 32
        %v1630 = vpop.permute.xlu0 %1629
        %1631 = vrot.lane.b32.xlu0 %v1610, 32
        %v1632 = vpop.permute.xlu0 %1631
        %1633 = vrot.lane.b32.xlu0 %v1611, 32
        %v1634 = vpop.permute.xlu0 %1633
        %1635 = vrot.lane.b32.xlu0 %v1612, 32
        %v1636 = vpop.permute.xlu0 %1635
        %vm1645 = vcmask 392448
        %1646 = vst.msk [vmem:[%s271] sm:$0xff] %vm1645, %v1622
        %1647 = vst.msk [vmem:[%s271 + $0x8] sm:$0xff] %vm1645, %v1624
        %1648 = vst.msk [vmem:[%s271 + $0x10] sm:$0xff] %vm1645, %v1626
        %1649 = vst.msk [vmem:[%s271 + $0x18] sm:$0xff] %vm1645, %v1628
        %1650 = vst.msk [vmem:[%s271 + $0x20] sm:$0xff] %vm1645, %v1630
        %1651 = vst.msk [vmem:[%s271 + $0x28] sm:$0xff] %vm1645, %v1632
        %1652 = vst.msk [vmem:[%s271 + $0x30] sm:$0xff] %vm1645, %v1634
        %1653 = vst.msk [vmem:[%s271 + $0x38] sm:$0xff] %vm1645, %v1636
        %s1654 = sand.u32 %s181, 1
        %s1655 = scalar_lea.sflag [#allocation5], %s1654
        %s1656 = sand.u32 %s181, 1
        %s1657 = smul.addr %s1656, 64
        %s1658 = scalar_lea.vmem [#allocation4], %s1657
        // Predicated region
        $region49: #{bottleneck_pallas.1} parent=47 // pred_check
          %p1659 = pneg %p191
        $region50: #{bottleneck_pallas.1} parent=47 // pred_check_branch
          %1661 = sbr.rel (%p1659) target = $region52
        $region51: #{bottleneck_pallas.1} parent=47 // pred_region
          %s1663 = ssub.s32 1024, 1024
          %1664 = vsyncadd %s1655, %s1663
          %s1665 = smul.addr %s21, 8
          %s1666 = smul.addr %s1665, 128
          %s1667 = scalar_lea.hbm %s7, %s1666
          %s1668 = sshll.u32 %s1658, 4
          %s1669 = int_to_ptr.vmem [resolvable:$true] %s1668
          %1674 = dma.vmem_to_hbm [thread:$0]  %s1669, 1024, %s1667, %s1655, 128, 128, 8
        $region52: #{bottleneck_pallas.1} parent=47 // pred_fallthru
          _
      $region48: #{bottleneck_pallas.1} parent=5 // pred_fallthru
        _
      %p1675 = scmp.le.s32.totalorder 2, %s16
      // Predicated region
      $region53: #{bottleneck_pallas.1} parent=5 // pred_check
        %p1676 = pneg %p1675
      $region54: #{bottleneck_pallas.1} parent=5 // pred_check_branch
        %1678 = sbr.rel (%p1676) target = $region56
      $region55: #{bottleneck_pallas.1} parent=5 // pred_region
        %s1679 = ssub.s32 %s16, 2
        // Predicated region
        $region57: #{bottleneck_pallas.1} parent=55 // pred_check
          %p1680 = pneg %p197
        $region58: #{bottleneck_pallas.1} parent=55 // pred_check_branch
          %1682 = sbr.rel (%p1680) target = $region60
        $region59: #{bottleneck_pallas.1} parent=55 // pred_region
          %s1683 = sand.u32 %s182, 1
          %s1684 = scalar_lea.sflag [#allocation5], %s1683
          %s1685 = sand.u32 %s182, 1
          %s1686 = smul.addr %s1685, 64
          %s1687 = scalar_lea.vmem [#allocation4], %s1686
          %1688 = dma.done %s1684, 1024
        $region60: #{bottleneck_pallas.1} parent=55 // pred_fallthru
          _
      $region56: #{bottleneck_pallas.1} parent=5 // pred_fallthru
        _
    $region6: #{bottleneck_pallas.1} parent=1 // loop_footer
      %s20 = sadd.s32 1, %s16
    $region7: #{bottleneck_pallas.1} parent=1 // loop_footer_branch
      %15 = sbr.rel target = $region3
    $region8: #{bottleneck_pallas.1} parent=1 // loop_exit
      _
    %1689 = vsyncpa [#allocation5], 1
    %s1690 = scalar_lea.sflag [#allocation5], 1
    %1691 = vsyncpa %s1690, 1

</llo_original>
